<compile_context>
chip_gen: v7x
topology: tpu7x:2x2x1
jax: 0.10.0
libtpu: 0.0.40
codegen_flags: <defaults>
</compile_context>

<pallas_src>
import functools

import jax
import jax.numpy as jnp
from jax import lax
from jax.experimental import pallas as pl
from jax.experimental.pallas import tpu as pltpu

LANE = 128
FAST_MAX_N = 1024                         # single-tile resident kernel up to here
STREAM_TILE = 1024                        # row / K tile of the streamed kernel
XK_RESIDENT_MAX_BYTES = 8 * 1024 * 1024   # keep full X resident in VMEM below this
VMEM_LIMIT_BYTES = 48 * 1024 * 1024       # safe on v5e/v6e (128 MiB) and v7x (64 MiB)


def _round_up(a, b):
    return ((a + b - 1) // b) * b


def _mlp(inp, wa_ref, ba_ref, wb_ref, bb_ref):
    """Linear -> ReLU -> Linear on a (rows, Dp) f32 tile (weights are refs)."""
    h = jnp.dot(inp, wa_ref[...], preferred_element_type=jnp.float32) + ba_ref[...]
    h = jnp.maximum(h, 0.0)
    return jnp.dot(h, wb_ref[...], preferred_element_type=jnp.float32) + bb_ref[...]


# ----------------------------------------------------------------------------
# Kernel 1: small-N fully-resident fast path (single grid step).
# ----------------------------------------------------------------------------
def _small_kernel(xk_ref, hops_ref, xm_ref,
                  w0a, b0a, w0b, b0b, w1a, b1a, w1b, b1b,
                  w2a, b2a, w2b, b2b, w3a, b3a, w3b, b3b,
                  out_ref):
    _, n, _ = hops_ref.shape
    # One stacked MXU contraction: (3N, N) @ (N, Dp), bf16 in / f32 out.
    # Merging the leading dims is a layout no-op (n is a multiple of 128).
    h = hops_ref[...].reshape(3 * n, n)
    agg = jnp.dot(h, xk_ref[...], preferred_element_type=jnp.float32)
    out = _mlp(xm_ref[...], w0a, b0a, w0b, b0b)
    out = out + _mlp(agg[0 * n:1 * n, :], w1a, b1a, w1b, b1b)
    out = out + _mlp(agg[1 * n:2 * n, :], w2a, b2a, w2b, b2b)
    out = out + _mlp(agg[2 * n:3 * n, :], w3a, b3a, w3b, b3b)
    out_ref[...] = out.astype(out_ref.dtype)


# ----------------------------------------------------------------------------
# Kernel 2: streamed / tiled path for large N.
# ----------------------------------------------------------------------------
def _streamed_kernel(n_valid, tile, xk_resident,
                     xk_ref, h1_ref, h2_ref, h3_ref, xm_ref,
                     w0a, b0a, w0b, b0b, w1a, b1a, w1b, b1b,
                     w2a, b2a, w2b, b2b, w3a, b3a, w3b, b3b,
                     out_ref, acc1_ref, acc2_ref, acc3_ref):
    k = pl.program_id(1)
    nk = pl.num_programs(1)

    # RHS X slab for this K step (bf16): sliced from the VMEM-resident copy
    # when it fits, otherwise it arrives as a streamed (tile, Dp) block.
    if xk_resident:
        start = pl.multiple_of(k * tile, tile)
        xk = xk_ref[pl.ds(start, tile), :]
    else:
        xk = xk_ref[...]

    h1 = h1_ref[...]
    h2 = h2_ref[...]
    h3 = h3_ref[...]
    if n_valid % tile != 0:
        # Pallas leaves out-of-bounds regions of partial edge blocks
        # undefined; zero the ragged K tail so garbage (possibly NaN/Inf)
        # cannot leak into valid rows through the contraction.  Row-tail
        # garbage only produces discarded output rows and needs no mask.
        col = k * tile + lax.broadcasted_iota(jnp.int32, (1, tile), 1)
        keep = col < n_valid
        h1 = jnp.where(keep, h1, 0.0)
        h2 = jnp.where(keep, h2, 0.0)
        h3 = jnp.where(keep, h3, 0.0)

    # bf16 MXU contraction with f32 accumulation.  Hop data streams once from
    # HBM in its original f32; the in-kernel cast is VPU work hidden under DMA.
    c1 = jnp.dot(h1.astype(jnp.bfloat16), xk, preferred_element_type=jnp.float32)
    c2 = jnp.dot(h2.astype(jnp.bfloat16), xk, preferred_element_type=jnp.float32)
    c3 = jnp.dot(h3.astype(jnp.bfloat16), xk, preferred_element_type=jnp.float32)

    @pl.when(k == 0)
    def _write_first():            # no zero-init + RMW on the first K step
        acc1_ref[...] = c1
        acc2_ref[...] = c2
        acc3_ref[...] = c3

    @pl.when(k > 0)
    def _accumulate():
        acc1_ref[...] += c1
        acc2_ref[...] += c2
        acc3_ref[...] += c3

    @pl.when(k == nk - 1)
    def _finalize():
        out = _mlp(xm_ref[...], w0a, b0a, w0b, b0b)
        out = out + _mlp(acc1_ref[...], w1a, b1a, w1b, b1b)
        out = out + _mlp(acc2_ref[...], w2a, b2a, w2b, b2b)
        out = out + _mlp(acc3_ref[...], w3a, b3a, w3b, b3b)
        out_ref[...] = out.astype(out_ref.dtype)


# ----------------------------------------------------------------------------
# Wrappers
# ----------------------------------------------------------------------------
def _pad_params(params, D, H1, H2, Dp, H1p, H2p):
    flat = []
    for (wa, ba, wb, bb) in params:
        wa_p = jnp.zeros((Dp, H1p), jnp.float32).at[:D, :H1].set(wa.astype(jnp.float32))
        ba_p = jnp.zeros((1, H1p), jnp.float32).at[:, :H1].set(
            ba.reshape(1, H1).astype(jnp.float32))
        wb_p = jnp.zeros((H1p, H2p), jnp.float32).at[:H1, :H2].set(wb.astype(jnp.float32))
        bb_p = jnp.zeros((1, H2p), jnp.float32).at[:, :H2].set(
            bb.reshape(1, H2).astype(jnp.float32))
        flat += [wa_p, ba_p, wb_p, bb_p]
    return flat


def _pad_x(x, walk_feats, rows_pad, Dp):
    """concat([x, walk_feats], 1), zero-padded to (rows_pad, Dp) f32."""
    N, in_dim = x.shape
    D = in_dim + walk_feats.shape[1]
    Xp = jnp.zeros((rows_pad, Dp), jnp.float32)
    Xp = Xp.at[:N, :in_dim].set(x.astype(jnp.float32))
    Xp = Xp.at[:N, in_dim:D].set(walk_feats.astype(jnp.float32))
    return Xp


def _forward_small(x, walk_feats, hop1, hop2, hop3, flat_params, Dp, H1p, H2p):
    N = x.shape[0]
    Nf = _round_up(N, LANE)
    Xp = _pad_x(x, walk_feats, Nf, Dp)
    Xk = Xp.astype(jnp.bfloat16)
    hops = jnp.zeros((3, Nf, Nf), jnp.bfloat16)
    hops = hops.at[0, :N, :N].set(hop1.astype(jnp.bfloat16))
    hops = hops.at[1, :N, :N].set(hop2.astype(jnp.bfloat16))
    hops = hops.at[2, :N, :N].set(hop3.astype(jnp.bfloat16))

    def _const_spec(shape):
        return pl.BlockSpec(shape, lambda i: (0,) * len(shape))

    in_arrays = [Xk, hops, Xp] + flat_params
    in_specs = [_const_spec(a.shape) for a in in_arrays]
    out_spec = _const_spec((Nf, H2p))

    flops = 3 * 2 * Nf * Nf * Dp + 4 * (2 * Nf * Dp * H1p + 2 * Nf * H1p * H2p)
    bytes_accessed = (int(hops.size) * 2 + int(Xk.size) * 2 + int(Xp.size) * 4
                      + sum(int(p.size) * 4 for p in flat_params) + Nf * H2p * 4)

    return pl.pallas_call(
        _small_kernel,
        out_shape=jax.ShapeDtypeStruct((Nf, H2p), jnp.float32),
        grid_spec=pltpu.PrefetchScalarGridSpec(
            num_scalar_prefetch=0,
            grid=(1,),
            in_specs=in_specs,
            out_specs=out_spec,
        ),
        compiler_params=pltpu.CompilerParams(
            dimension_semantics=("arbitrary",),
            vmem_limit_bytes=VMEM_LIMIT_BYTES,
        ),
        cost_estimate=pl.CostEstimate(flops=flops, transcendentals=0,
                                      bytes_accessed=bytes_accessed),
    )(*in_arrays)


def _forward_streamed(x, walk_feats, hop1, hop2, hop3, flat_params, Dp, H1p, H2p):
    N = x.shape[0]
    T = STREAM_TILE
    Np = _round_up(N, T)
    Xp = _pad_x(x, walk_feats, Np, Dp)      # small: (Np, 128) — cheap to pad
    Xk = Xp.astype(jnp.bfloat16)

    xk_resident = (Np * Dp * 2) <= XK_RESIDENT_MAX_BYTES
    if xk_resident:
        # Constant block index => DMA'd once, no per-row-tile re-streaming.
        xk_spec = pl.BlockSpec((Np, Dp), lambda i, k: (0, 0))
    else:
        xk_spec = pl.BlockSpec((T, Dp), lambda i, k: (k, 0))

    hop_spec = pl.BlockSpec((T, T), lambda i, k: (i, k))
    xm_spec = pl.BlockSpec((T, Dp), lambda i, k: (i, 0))
    param_specs = [pl.BlockSpec(p.shape, lambda i, k: (0, 0)) for p in flat_params]
    out_spec = pl.BlockSpec((T, H2p), lambda i, k: (i, 0))

    grid = (Np // T, Np // T)

    xk_bytes = Np * Dp * 2 if xk_resident else (Np // T) * Np * Dp * 2
    flops = 3 * 2 * N * N * Dp + 4 * (2 * Np * Dp * H1p + 2 * Np * H1p * H2p)
    bytes_accessed = (3 * N * N * 4            # one pass over the f32 hops
                      + xk_bytes + Np * Dp * 4
                      + sum(int(p.size) * 4 for p in flat_params)
                      + Np * H2p * 4)

    kernel = functools.partial(_streamed_kernel, N, T, xk_resident)

    return pl.pallas_call(
        kernel,
        out_shape=jax.ShapeDtypeStruct((Np, H2p), jnp.float32),
        grid_spec=pltpu.PrefetchScalarGridSpec(
            num_scalar_prefetch=0,
            grid=grid,
            in_specs=[xk_spec, hop_spec, hop_spec, hop_spec, xm_spec] + param_specs,
            out_specs=out_spec,
            scratch_shapes=[pltpu.VMEM((T, Dp), jnp.float32)] * 3,
        ),
        compiler_params=pltpu.CompilerParams(
            dimension_semantics=("parallel", "arbitrary"),
            vmem_limit_bytes=VMEM_LIMIT_BYTES,
        ),
        cost_estimate=pl.CostEstimate(flops=flops, transcendentals=0,
                                      bytes_accessed=bytes_accessed),
    )(Xk, hop1, hop2, hop3, Xp, *flat_params)


@jax.jit
def subgraph_gnn_forward(x, walk_feats, hop1, hop2, hop3, params):
    """params: list of 4 tuples (W1 (D,H1), b1 (1,H1), W2 (H1,H2), b2 (1,H2))."""
    N, in_dim = x.shape
    D = in_dim + walk_feats.shape[1]
    H1 = params[0][0].shape[1]
    H2 = params[0][2].shape[1]
    Dp = _round_up(D, LANE)
    H1p = _round_up(H1, LANE)
    H2p = _round_up(H2, LANE)
    flat_params = _pad_params(params, D, H1, H2, Dp, H1p, H2p)

    if N <= FAST_MAX_N:
        out_pad = _forward_small(x, walk_feats, hop1, hop2, hop3,
                                 flat_params, Dp, H1p, H2p)
    else:
        out_pad = _forward_streamed(x, walk_feats, hop1, hop2, hop3,
                                    flat_params, Dp, H1p, H2p)
    return out_pad[:N, :H2]


# ----------------------------------------------------------------------------
# Pure-JAX reference and test harness
# ----------------------------------------------------------------------------
def init_linear(key, fan_in, fan_out):
    # deterministic nn.Linear-style init: U(-1/sqrt(fan_in), 1/sqrt(fan_in))
    k1, k2 = jax.random.split(key)
    bound = 1.0 / (fan_in ** 0.5)
    w = jax.random.uniform(k1, (fan_in, fan_out), jnp.float32, -bound, bound)
    b = jax.random.uniform(k2, (1, fan_out), jnp.float32, -bound, bound)
    return w, b


def reference_forward(x, walk_feats, hop1, hop2, hop3, params,
                      hop_matmul_dtype=jnp.float32):
    X = jnp.concatenate([x, walk_feats], axis=1)
    Xc = X.astype(hop_matmul_dtype)
    hi = lax.Precision.HIGHEST

    def mlp(inp, p):
        wa, ba, wb, bb = p
        h = jnp.maximum(jnp.dot(inp, wa, precision=hi,
                                preferred_element_type=jnp.float32) + ba, 0.0)
        return jnp.dot(h, wb, precision=hi,
                       preferred_element_type=jnp.float32) + bb

    def hopmm(h):
        return jnp.dot(h.astype(hop_matmul_dtype), Xc, precision=hi,
                       preferred_element_type=jnp.float32)

    return (mlp(X, params[0]) + mlp(hopmm(hop1), params[1])
            + mlp(hopmm(hop2), params[2]) + mlp(hopmm(hop3), params[3]))


if __name__ == "__main__":
    in_dim = 10
    random_walk_dim = 5            # walk_feats has random_walk_dim + 1 columns
    hidden1_dim = 32
    hidden2_dim = 8
    D = in_dim + random_walk_dim + 1

    key = jax.random.PRNGKey(0)
    keys = jax.random.split(key, 24)

    # 4 independent two-layer MLPs (layer0..layer3 of Subgraph_GNN)
    params = []
    for i in range(4):
        wa, ba = init_linear(keys[2 * i], D, hidden1_dim)
        wb, bb = init_linear(keys[2 * i + 1], hidden1_dim, hidden2_dim)
        params.append((wa, ba, wb, bb))

    # TODO(synk): GNN branch (GCN/GAT/GIN message passing) is unused with the
    # default use_base_gnn=False, so it is not implemented here.

    # ---- Case 1: small graph (fully-resident fast path) ---------------------
    N = 16
    x = jax.random.normal(keys[8], (N, in_dim), jnp.float32)
    walk_feats = jax.random.normal(keys[9], (N, random_walk_dim + 1), jnp.float32)
    hop1 = jax.random.uniform(keys[10], (N, N), jnp.float32)
    hop2 = jax.random.uniform(keys[11], (N, N), jnp.float32)
    hop3 = jax.random.uniform(keys[12], (N, N), jnp.float32)

    out = jax.block_until_ready(
        subgraph_gnn_forward(x, walk_feats, hop1, hop2, hop3, params))
    assert out.shape == (N, hidden2_dim)

    # Matched-precision check (bf16 hop contraction / f32 accumulation).
    ref_matched = reference_forward(x, walk_feats, hop1, hop2, hop3, params,
                                    hop_matmul_dtype=jnp.bfloat16)
    assert jnp.allclose(out, ref_matched, atol=1e-3, rtol=1e-3), \
        float(jnp.max(jnp.abs(out - ref_matched)))

    # Loose sanity check against the pure-f32 torch-style forward.
    ref_f32 = reference_forward(x, walk_feats, hop1, hop2, hop3, params,
                                hop_matmul_dtype=jnp.float32)
    assert jnp.allclose(out, ref_f32, atol=5e-2, rtol=5e-2), \
        float(jnp.max(jnp.abs(out - ref_f32)))

    # ---- Case 2: larger graph exercising the streamed/tiled path -----------
    # grid (2, 2): K accumulation, ragged N % 1024 tail masking, resident X.
    N2 = 1100
    x2 = jax.random.normal(keys[13], (N2, in_dim), jnp.float32)
    walk2 = jax.random.normal(keys[14], (N2, random_walk_dim + 1), jnp.float32)
    h2_1 = jax.random.uniform(keys[15], (N2, N2), jnp.float32)
    h2_2 = jax.random.uniform(keys[16], (N2, N2), jnp.float32)
    h2_3 = jax.random.uniform(keys[17], (N2, N2), jnp.float32)

    out2 = jax.block_until_ready(
        subgraph_gnn_forward(x2, walk2, h2_1, h2_2, h2_3, params))
    assert out2.shape == (N2, hidden2_dim)

    ref2 = reference_forward(x2, walk2, h2_1, h2_2, h2_3, params,
                             hop_matmul_dtype=jnp.bfloat16)
    assert jnp.allclose(out2, ref2, atol=2e-2, rtol=2e-2), \
        float(jnp.max(jnp.abs(out2 - ref2)))

    print("KERNEL_OK")
</pallas_src>

<mosaic_0001>
module attributes {stable_mosaic.version = 11 : i64} {
  func.func @_small_kernel(%arg0: i32, %arg1: memref<128x128xbf16, #tpu.memory_space<vmem>>, %arg2: memref<3x128x128xbf16, #tpu.memory_space<vmem>>, %arg3: memref<128x128xf32, #tpu.memory_space<vmem>>, %arg4: memref<128x128xf32, #tpu.memory_space<vmem>>, %arg5: memref<1x128xf32, #tpu.memory_space<vmem>>, %arg6: memref<128x128xf32, #tpu.memory_space<vmem>>, %arg7: memref<1x128xf32, #tpu.memory_space<vmem>>, %arg8: memref<128x128xf32, #tpu.memory_space<vmem>>, %arg9: memref<1x128xf32, #tpu.memory_space<vmem>>, %arg10: memref<128x128xf32, #tpu.memory_space<vmem>>, %arg11: memref<1x128xf32, #tpu.memory_space<vmem>>, %arg12: memref<128x128xf32, #tpu.memory_space<vmem>>, %arg13: memref<1x128xf32, #tpu.memory_space<vmem>>, %arg14: memref<128x128xf32, #tpu.memory_space<vmem>>, %arg15: memref<1x128xf32, #tpu.memory_space<vmem>>, %arg16: memref<128x128xf32, #tpu.memory_space<vmem>>, %arg17: memref<1x128xf32, #tpu.memory_space<vmem>>, %arg18: memref<128x128xf32, #tpu.memory_space<vmem>>, %arg19: memref<1x128xf32, #tpu.memory_space<vmem>>, %arg20: memref<128x128xf32, #tpu.memory_space<vmem>>) attributes {dimension_semantics = [#tpu.dimension_semantics<arbitrary>], iteration_bounds = array<i64: 1>, scalar_prefetch = 0 : i64, scratch_operands = 0 : i64, tpu.core_type = #tpu.core_type<tc>, window_params = [{pipeline_mode = #tpu.pipeline_mode<synchronous>, transform_indices = @transform_0, window_bounds = array<i64: 128, 128>}, {pipeline_mode = #tpu.pipeline_mode<synchronous>, transform_indices = @transform_1, window_bounds = array<i64: 3, 128, 128>}, {pipeline_mode = #tpu.pipeline_mode<synchronous>, transform_indices = @transform_2, window_bounds = array<i64: 128, 128>}, {pipeline_mode = #tpu.pipeline_mode<synchronous>, transform_indices = @transform_3, window_bounds = array<i64: 128, 128>}, {pipeline_mode = #tpu.pipeline_mode<synchronous>, transform_indices = @transform_4, window_bounds = array<i64: 1, 128>}, {pipeline_mode = #tpu.pipeline_mode<synchronous>, transform_indices = @transform_5, window_bounds = array<i64: 128, 128>}, {pipeline_mode = #tpu.pipeline_mode<synchronous>, transform_indices = @transform_6, window_bounds = array<i64: 1, 128>}, {pipeline_mode = #tpu.pipeline_mode<synchronous>, transform_indices = @transform_7, window_bounds = array<i64: 128, 128>}, {pipeline_mode = #tpu.pipeline_mode<synchronous>, transform_indices = @transform_8, window_bounds = array<i64: 1, 128>}, {pipeline_mode = #tpu.pipeline_mode<synchronous>, transform_indices = @transform_9, window_bounds = array<i64: 128, 128>}, {pipeline_mode = #tpu.pipeline_mode<synchronous>, transform_indices = @transform_10, window_bounds = array<i64: 1, 128>}, {pipeline_mode = #tpu.pipeline_mode<synchronous>, transform_indices = @transform_11, window_bounds = array<i64: 128, 128>}, {pipeline_mode = #tpu.pipeline_mode<synchronous>, transform_indices = @transform_12, window_bounds = array<i64: 1, 128>}, {pipeline_mode = #tpu.pipeline_mode<synchronous>, transform_indices = @transform_13, window_bounds = array<i64: 128, 128>}, {pipeline_mode = #tpu.pipeline_mode<synchronous>, transform_indices = @transform_14, window_bounds = array<i64: 1, 128>}, {pipeline_mode = #tpu.pipeline_mode<synchronous>, transform_indices = @transform_15, window_bounds = array<i64: 128, 128>}, {pipeline_mode = #tpu.pipeline_mode<synchronous>, transform_indices = @transform_16, window_bounds = array<i64: 1, 128>}, {pipeline_mode = #tpu.pipeline_mode<synchronous>, transform_indices = @transform_17, window_bounds = array<i64: 128, 128>}, {pipeline_mode = #tpu.pipeline_mode<synchronous>, transform_indices = @transform_18, window_bounds = array<i64: 1, 128>}, {pipeline_mode = #tpu.pipeline_mode<synchronous>, transform_indices = @transform_19, window_bounds = array<i64: 128, 128>}]} {
    %c0 = arith.constant 0 : index
    %c0_0 = arith.constant 0 : index
    %c0_1 = arith.constant 0 : index
    %0 = vector.load %arg2[%c0, %c0_0, %c0_1] : memref<3x128x128xbf16, #tpu.memory_space<vmem>>, vector<3x128x128xbf16>
    %1 = vector.shape_cast %0 : vector<3x128x128xbf16> to vector<384x128xbf16>
    %c0_2 = arith.constant 0 : index
    %c0_3 = arith.constant 0 : index
    %2 = vector.load %arg1[%c0_2, %c0_3] : memref<128x128xbf16, #tpu.memory_space<vmem>>, vector<128x128xbf16>
    %cst = arith.constant dense<0.000000e+00> : vector<384x128xf32>
    %3 = tpu.matmul %1, %2, %cst {dimension_numbers = #tpu.dot_dimension_numbers<[1], [0], [0], [1], [0, 0, 1, 1], [], []>} : vector<384x128xbf16>, vector<128x128xbf16>, vector<384x128xf32> -> vector<384x128xf32>
    %c0_4 = arith.constant 0 : index
    %c0_5 = arith.constant 0 : index
    %4 = vector.load %arg3[%c0_4, %c0_5] : memref<128x128xf32, #tpu.memory_space<vmem>>, vector<128x128xf32>
    %c0_6 = arith.constant 0 : index
    %c0_7 = arith.constant 0 : index
    %5 = vector.load %arg4[%c0_6, %c0_7] : memref<128x128xf32, #tpu.memory_space<vmem>>, vector<128x128xf32>
    %cst_8 = arith.constant dense<0.000000e+00> : vector<128x128xf32>
    %6 = tpu.matmul %4, %5, %cst_8 {dimension_numbers = #tpu.dot_dimension_numbers<[1], [0], [0], [1], [0, 0, 1, 1], [], []>} : vector<128x128xf32>, vector<128x128xf32>, vector<128x128xf32> -> vector<128x128xf32>
    %c0_9 = arith.constant 0 : index
    %c0_10 = arith.constant 0 : index
    %7 = vector.load %arg5[%c0_9, %c0_10] : memref<1x128xf32, #tpu.memory_space<vmem>>, vector<1x128xf32>
    %8 = vector.broadcast %7 : vector<1x128xf32> to vector<128x128xf32>
    %9 = arith.addf %6, %8 : vector<128x128xf32>
    %cst_11 = arith.constant 0.000000e+00 : f32
    %10 = vector.broadcast %cst_11 : f32 to vector<128x128xf32>
    %11 = arith.maximumf %9, %10 : vector<128x128xf32>
    %c0_12 = arith.constant 0 : index
    %c0_13 = arith.constant 0 : index
    %12 = vector.load %arg6[%c0_12, %c0_13] : memref<128x128xf32, #tpu.memory_space<vmem>>, vector<128x128xf32>
    %cst_14 = arith.constant dense<0.000000e+00> : vector<128x128xf32>
    %13 = tpu.matmul %11, %12, %cst_14 {dimension_numbers = #tpu.dot_dimension_numbers<[1], [0], [0], [1], [0, 0, 1, 1], [], []>} : vector<128x128xf32>, vector<128x128xf32>, vector<128x128xf32> -> vector<128x128xf32>
    %c0_15 = arith.constant 0 : index
    %c0_16 = arith.constant 0 : index
    %14 = vector.load %arg7[%c0_15, %c0_16] : memref<1x128xf32, #tpu.memory_space<vmem>>, vector<1x128xf32>
    %15 = vector.broadcast %14 : vector<1x128xf32> to vector<128x128xf32>
    %16 = arith.addf %13, %15 : vector<128x128xf32>
    %17 = vector.extract_strided_slice %3 {offsets = [0, 0], sizes = [128, 128], strides = [1, 1]} : vector<384x128xf32> to vector<128x128xf32>
    %c0_17 = arith.constant 0 : index
    %c0_18 = arith.constant 0 : index
    %18 = vector.load %arg8[%c0_17, %c0_18] : memref<128x128xf32, #tpu.memory_space<vmem>>, vector<128x128xf32>
    %cst_19 = arith.constant dense<0.000000e+00> : vector<128x128xf32>
    %19 = tpu.matmul %17, %18, %cst_19 {dimension_numbers = #tpu.dot_dimension_numbers<[1], [0], [0], [1], [0, 0, 1, 1], [], []>} : vector<128x128xf32>, vector<128x128xf32>, vector<128x128xf32> -> vector<128x128xf32>
    %c0_20 = arith.constant 0 : index
    %c0_21 = arith.constant 0 : index
    %20 = vector.load %arg9[%c0_20, %c0_21] : memref<1x128xf32, #tpu.memory_space<vmem>>, vector<1x128xf32>
    %21 = vector.broadcast %20 : vector<1x128xf32> to vector<128x128xf32>
    %22 = arith.addf %19, %21 : vector<128x128xf32>
    %cst_22 = arith.constant 0.000000e+00 : f32
    %23 = vector.broadcast %cst_22 : f32 to vector<128x128xf32>
    %24 = arith.maximumf %22, %23 : vector<128x128xf32>
    %c0_23 = arith.constant 0 : index
    %c0_24 = arith.constant 0 : index
    %25 = vector.load %arg10[%c0_23, %c0_24] : memref<128x128xf32, #tpu.memory_space<vmem>>, vector<128x128xf32>
    %cst_25 = arith.constant dense<0.000000e+00> : vector<128x128xf32>
    %26 = tpu.matmul %24, %25, %cst_25 {dimension_numbers = #tpu.dot_dimension_numbers<[1], [0], [0], [1], [0, 0, 1, 1], [], []>} : vector<128x128xf32>, vector<128x128xf32>, vector<128x128xf32> -> vector<128x128xf32>
    %c0_26 = arith.constant 0 : index
    %c0_27 = arith.constant 0 : index
    %27 = vector.load %arg11[%c0_26, %c0_27] : memref<1x128xf32, #tpu.memory_space<vmem>>, vector<1x128xf32>
    %28 = vector.broadcast %27 : vector<1x128xf32> to vector<128x128xf32>
    %29 = arith.addf %26, %28 : vector<128x128xf32>
    %30 = arith.addf %16, %29 : vector<128x128xf32>
    %31 = vector.extract_strided_slice %3 {offsets = [128, 0], sizes = [128, 128], strides = [1, 1]} : vector<384x128xf32> to vector<128x128xf32>
    %c0_28 = arith.constant 0 : index
    %c0_29 = arith.constant 0 : index
    %32 = vector.load %arg12[%c0_28, %c0_29] : memref<128x128xf32, #tpu.memory_space<vmem>>, vector<128x128xf32>
    %cst_30 = arith.constant dense<0.000000e+00> : vector<128x128xf32>
    %33 = tpu.matmul %31, %32, %cst_30 {dimension_numbers = #tpu.dot_dimension_numbers<[1], [0], [0], [1], [0, 0, 1, 1], [], []>} : vector<128x128xf32>, vector<128x128xf32>, vector<128x128xf32> -> vector<128x128xf32>
    %c0_31 = arith.constant 0 : index
    %c0_32 = arith.constant 0 : index
    %34 = vector.load %arg13[%c0_31, %c0_32] : memref<1x128xf32, #tpu.memory_space<vmem>>, vector<1x128xf32>
    %35 = vector.broadcast %34 : vector<1x128xf32> to vector<128x128xf32>
    %36 = arith.addf %33, %35 : vector<128x128xf32>
    %cst_33 = arith.constant 0.000000e+00 : f32
    %37 = vector.broadcast %cst_33 : f32 to vector<128x128xf32>
    %38 = arith.maximumf %36, %37 : vector<128x128xf32>
    %c0_34 = arith.constant 0 : index
    %c0_35 = arith.constant 0 : index
    %39 = vector.load %arg14[%c0_34, %c0_35] : memref<128x128xf32, #tpu.memory_space<vmem>>, vector<128x128xf32>
    %cst_36 = arith.constant dense<0.000000e+00> : vector<128x128xf32>
    %40 = tpu.matmul %38, %39, %cst_36 {dimension_numbers = #tpu.dot_dimension_numbers<[1], [0], [0], [1], [0, 0, 1, 1], [], []>} : vector<128x128xf32>, vector<128x128xf32>, vector<128x128xf32> -> vector<128x128xf32>
    %c0_37 = arith.constant 0 : index
    %c0_38 = arith.constant 0 : index
    %41 = vector.load %arg15[%c0_37, %c0_38] : memref<1x128xf32, #tpu.memory_space<vmem>>, vector<1x128xf32>
    %42 = vector.broadcast %41 : vector<1x128xf32> to vector<128x128xf32>
    %43 = arith.addf %40, %42 : vector<128x128xf32>
    %44 = arith.addf %30, %43 : vector<128x128xf32>
    %45 = vector.extract_strided_slice %3 {offsets = [256, 0], sizes = [128, 128], strides = [1, 1]} : vector<384x128xf32> to vector<128x128xf32>
    %c0_39 = arith.constant 0 : index
    %c0_40 = arith.constant 0 : index
    %46 = vector.load %arg16[%c0_39, %c0_40] : memref<128x128xf32, #tpu.memory_space<vmem>>, vector<128x128xf32>
    %cst_41 = arith.constant dense<0.000000e+00> : vector<128x128xf32>
    %47 = tpu.matmul %45, %46, %cst_41 {dimension_numbers = #tpu.dot_dimension_numbers<[1], [0], [0], [1], [0, 0, 1, 1], [], []>} : vector<128x128xf32>, vector<128x128xf32>, vector<128x128xf32> -> vector<128x128xf32>
    %c0_42 = arith.constant 0 : index
    %c0_43 = arith.constant 0 : index
    %48 = vector.load %arg17[%c0_42, %c0_43] : memref<1x128xf32, #tpu.memory_space<vmem>>, vector<1x128xf32>
    %49 = vector.broadcast %48 : vector<1x128xf32> to vector<128x128xf32>
    %50 = arith.addf %47, %49 : vector<128x128xf32>
    %cst_44 = arith.constant 0.000000e+00 : f32
    %51 = vector.broadcast %cst_44 : f32 to vector<128x128xf32>
    %52 = arith.maximumf %50, %51 : vector<128x128xf32>
    %c0_45 = arith.constant 0 : index
    %c0_46 = arith.constant 0 : index
    %53 = vector.load %arg18[%c0_45, %c0_46] : memref<128x128xf32, #tpu.memory_space<vmem>>, vector<128x128xf32>
    %cst_47 = arith.constant dense<0.000000e+00> : vector<128x128xf32>
    %54 = tpu.matmul %52, %53, %cst_47 {dimension_numbers = #tpu.dot_dimension_numbers<[1], [0], [0], [1], [0, 0, 1, 1], [], []>} : vector<128x128xf32>, vector<128x128xf32>, vector<128x128xf32> -> vector<128x128xf32>
    %c0_48 = arith.constant 0 : index
    %c0_49 = arith.constant 0 : index
    %55 = vector.load %arg19[%c0_48, %c0_49] : memref<1x128xf32, #tpu.memory_space<vmem>>, vector<1x128xf32>
    %56 = vector.broadcast %55 : vector<1x128xf32> to vector<128x128xf32>
    %57 = arith.addf %54, %56 : vector<128x128xf32>
    %58 = arith.addf %44, %57 : vector<128x128xf32>
    %c0_50 = arith.constant 0 : index
    %c0_51 = arith.constant 0 : index
    %59 = vector.load %arg20[%c0_50, %c0_51] : memref<128x128xf32, #tpu.memory_space<vmem>>, vector<128x128xf32>
    tpu.vector_store %arg20[%c0_50, %c0_51], %58 {strides = array<i32>} : memref<128x128xf32, #tpu.memory_space<vmem>>, vector<128x128xf32>,
    return
  }
  func.func @transform_0(%arg0: i32) -> (i32, i32) {
    %c0_i32 = arith.constant 0 : i32
    %c0_i32_0 = arith.constant 0 : i32
    %c0_i32_1 = arith.constant 0 : i32
    return %c0_i32, %c0_i32_0 : i32, i32
  }
  func.func @transform_1(%arg0: i32) -> (i32, i32, i32) {
    %c0_i32 = arith.constant 0 : i32
    %c0_i32_0 = arith.constant 0 : i32
    %c0_i32_1 = arith.constant 0 : i32
    %c0_i32_2 = arith.constant 0 : i32
    return %c0_i32, %c0_i32_0, %c0_i32_1 : i32, i32, i32
  }
  func.func @transform_2(%arg0: i32) -> (i32, i32) {
    %c0_i32 = arith.constant 0 : i32
    %c0_i32_0 = arith.constant 0 : i32
    %c0_i32_1 = arith.constant 0 : i32
    return %c0_i32, %c0_i32_0 : i32, i32
  }
  func.func @transform_3(%arg0: i32) -> (i32, i32) {
    %c0_i32 = arith.constant 0 : i32
    %c0_i32_0 = arith.constant 0 : i32
    %c0_i32_1 = arith.constant 0 : i32
    return %c0_i32, %c0_i32_0 : i32, i32
  }
  func.func @transform_4(%arg0: i32) -> (i32, i32) {
    %c0_i32 = arith.constant 0 : i32
    %c0_i32_0 = arith.constant 0 : i32
    %c0_i32_1 = arith.constant 0 : i32
    return %c0_i32, %c0_i32_0 : i32, i32
  }
  func.func @transform_5(%arg0: i32) -> (i32, i32) {
    %c0_i32 = arith.constant 0 : i32
    %c0_i32_0 = arith.constant 0 : i32
    %c0_i32_1 = arith.constant 0 : i32
    return %c0_i32, %c0_i32_0 : i32, i32
  }
  func.func @transform_6(%arg0: i32) -> (i32, i32) {
    %c0_i32 = arith.constant 0 : i32
    %c0_i32_0 = arith.constant 0 : i32
    %c0_i32_1 = arith.constant 0 : i32
    return %c0_i32, %c0_i32_0 : i32, i32
  }
  func.func @transform_7(%arg0: i32) -> (i32, i32) {
    %c0_i32 = arith.constant 0 : i32
    %c0_i32_0 = arith.constant 0 : i32
    %c0_i32_1 = arith.constant 0 : i32
    return %c0_i32, %c0_i32_0 : i32, i32
  }
  func.func @transform_8(%arg0: i32) -> (i32, i32) {
    %c0_i32 = arith.constant 0 : i32
    %c0_i32_0 = arith.constant 0 : i32
    %c0_i32_1 = arith.constant 0 : i32
    return %c0_i32, %c0_i32_0 : i32, i32
  }
  func.func @transform_9(%arg0: i32) -> (i32, i32) {
    %c0_i32 = arith.constant 0 : i32
    %c0_i32_0 = arith.constant 0 : i32
    %c0_i32_1 = arith.constant 0 : i32
    return %c0_i32, %c0_i32_0 : i32, i32
  }
  func.func @transform_10(%arg0: i32) -> (i32, i32) {
    %c0_i32 = arith.constant 0 : i32
    %c0_i32_0 = arith.constant 0 : i32
    %c0_i32_1 = arith.constant 0 : i32
    return %c0_i32, %c0_i32_0 : i32, i32
  }
  func.func @transform_11(%arg0: i32) -> (i32, i32) {
    %c0_i32 = arith.constant 0 : i32
    %c0_i32_0 = arith.constant 0 : i32
    %c0_i32_1 = arith.constant 0 : i32
    return %c0_i32, %c0_i32_0 : i32, i32
  }
  func.func @transform_12(%arg0: i32) -> (i32, i32) {
    %c0_i32 = arith.constant 0 : i32
    %c0_i32_0 = arith.constant 0 : i32
    %c0_i32_1 = arith.constant 0 : i32
    return %c0_i32, %c0_i32_0 : i32, i32
  }
  func.func @transform_13(%arg0: i32) -> (i32, i32) {
    %c0_i32 = arith.constant 0 : i32
    %c0_i32_0 = arith.constant 0 : i32
    %c0_i32_1 = arith.constant 0 : i32
    return %c0_i32, %c0_i32_0 : i32, i32
  }
  func.func @transform_14(%arg0: i32) -> (i32, i32) {
    %c0_i32 = arith.constant 0 : i32
    %c0_i32_0 = arith.constant 0 : i32
    %c0_i32_1 = arith.constant 0 : i32
    return %c0_i32, %c0_i32_0 : i32, i32
  }
  func.func @transform_15(%arg0: i32) -> (i32, i32) {
    %c0_i32 = arith.constant 0 : i32
    %c0_i32_0 = arith.constant 0 : i32
    %c0_i32_1 = arith.constant 0 : i32
    return %c0_i32, %c0_i32_0 : i32, i32
  }
  func.func @transform_16(%arg0: i32) -> (i32, i32) {
    %c0_i32 = arith.constant 0 : i32
    %c0_i32_0 = arith.constant 0 : i32
    %c0_i32_1 = arith.constant 0 : i32
    return %c0_i32, %c0_i32_0 : i32, i32
  }
  func.func @transform_17(%arg0: i32) -> (i32, i32) {
    %c0_i32 = arith.constant 0 : i32
    %c0_i32_0 = arith.constant 0 : i32
    %c0_i32_1 = arith.constant 0 : i32
    return %c0_i32, %c0_i32_0 : i32, i32
  }
  func.func @transform_18(%arg0: i32) -> (i32, i32) {
    %c0_i32 = arith.constant 0 : i32
    %c0_i32_0 = arith.constant 0 : i32
    %c0_i32_1 = arith.constant 0 : i32
    return %c0_i32, %c0_i32_0 : i32, i32
  }
  func.func @transform_19(%arg0: i32) -> (i32, i32) {
    %c0_i32 = arith.constant 0 : i32
    %c0_i32_0 = arith.constant 0 : i32
    %c0_i32_1 = arith.constant 0 : i32
    return %c0_i32, %c0_i32_0 : i32, i32
  }
}

</mosaic_0001>

<llo_original>
// kernel: subgraph_gnn_forward.1
$region0: #{subgraph_gnn_forward.1}
  #allocation0 [shape = 'u32[]', space=smem, size = 0x4, offset = 0x4, fixed_abs, tag = 'smem constant byte address 0x4 - core index']
  #allocation1 [shape = 'u32[144,128]{1,0:T(1,128)}', space=vmem, size = 0x12000, scoped, tag = 'internal scratch']
  %s0 = inlined_call_operand.vmem [shape: bf16[128,128], index: 0, kind: input, shape index: {}]
  %s1 = inlined_call_operand.vmem [shape: bf16[3,128,128], index: 1, kind: input, shape index: {}]
  %s2 = inlined_call_operand.vmem [shape: f32[128,128], index: 2, kind: input, shape index: {}]
  %s3 = inlined_call_operand.vmem [shape: f32[128,128], index: 3, kind: input, shape index: {}]
  %s4 = inlined_call_operand.vmem [shape: f32[1,128], index: 4, kind: input, shape index: {}]
  %s5 = inlined_call_operand.vmem [shape: f32[128,128], index: 5, kind: input, shape index: {}]
  %s6 = inlined_call_operand.vmem [shape: f32[1,128], index: 6, kind: input, shape index: {}]
  %s7 = inlined_call_operand.vmem [shape: f32[128,128], index: 7, kind: input, shape index: {}]
  %s8 = inlined_call_operand.vmem [shape: f32[1,128], index: 8, kind: input, shape index: {}]
  %s9 = inlined_call_operand.vmem [shape: f32[128,128], index: 9, kind: input, shape index: {}]
  %s10 = inlined_call_operand.vmem [shape: f32[1,128], index: 10, kind: input, shape index: {}]
  %s11 = inlined_call_operand.vmem [shape: f32[128,128], index: 11, kind: input, shape index: {}]
  %s12 = inlined_call_operand.vmem [shape: f32[1,128], index: 12, kind: input, shape index: {}]
  %s13 = inlined_call_operand.vmem [shape: f32[128,128], index: 13, kind: input, shape index: {}]
  %s14 = inlined_call_operand.vmem [shape: f32[1,128], index: 14, kind: input, shape index: {}]
  %s15 = inlined_call_operand.vmem [shape: f32[128,128], index: 15, kind: input, shape index: {}]
  %s16 = inlined_call_operand.vmem [shape: f32[1,128], index: 16, kind: input, shape index: {}]
  %s17 = inlined_call_operand.vmem [shape: f32[128,128], index: 17, kind: input, shape index: {}]
  %s18 = inlined_call_operand.vmem [shape: f32[1,128], index: 18, kind: input, shape index: {}]
  %s19 = inlined_call_operand.vmem [shape: f32[128,128], index: 19, kind: output, shape index: {}]
  %s20 = sld [smem:[#allocation0]]
  $region86: #{subgraph_gnn_forward.1} parent=0
    _
  %s22 = ssub.s32 1, %s20
  %s23 = scalar_select 0, %s22, %s20
  // Predicated region
  $region2: #{subgraph_gnn_forward.1} parent=0 // pred_check
    _
  $region3: #{subgraph_gnn_forward.1} parent=0 // pred_check_branch
    %25 = sbr.rel (0) target = $region5
  $region4: #{subgraph_gnn_forward.1} parent=0 // pred_region
    _
  $region5: #{subgraph_gnn_forward.1} parent=0 // pred_fallthru
    _
  // Predicated region
  $region6: #{subgraph_gnn_forward.1} parent=0 // pred_check
    _
  $region7: #{subgraph_gnn_forward.1} parent=0 // pred_check_branch
    %27 = sbr.rel (0) target = $region9
  $region8: #{subgraph_gnn_forward.1} parent=0 // pred_region
    _
  $region9: #{subgraph_gnn_forward.1} parent=0 // pred_fallthru
    _
  // Predicated region
  $region10: #{subgraph_gnn_forward.1} parent=0 // pred_check
    _
  $region11: #{subgraph_gnn_forward.1} parent=0 // pred_check_branch
    %29 = sbr.rel (0) target = $region13
  $region12: #{subgraph_gnn_forward.1} parent=0 // pred_region
    _
  $region13: #{subgraph_gnn_forward.1} parent=0 // pred_fallthru
    _
  // Predicated region
  $region14: #{subgraph_gnn_forward.1} parent=0 // pred_check
    _
  $region15: #{subgraph_gnn_forward.1} parent=0 // pred_check_branch
    %31 = sbr.rel (0) target = $region17
  $region16: #{subgraph_gnn_forward.1} parent=0 // pred_region
    _
  $region17: #{subgraph_gnn_forward.1} parent=0 // pred_fallthru
    _
  // Predicated region
  $region18: #{subgraph_gnn_forward.1} parent=0 // pred_check
    _
  $region19: #{subgraph_gnn_forward.1} parent=0 // pred_check_branch
    %33 = sbr.rel (0) target = $region21
  $region20: #{subgraph_gnn_forward.1} parent=0 // pred_region
    _
  $region21: #{subgraph_gnn_forward.1} parent=0 // pred_fallthru
    _
  // Predicated region
  $region22: #{subgraph_gnn_forward.1} parent=0 // pred_check
    _
  $region23: #{subgraph_gnn_forward.1} parent=0 // pred_check_branch
    %35 = sbr.rel (0) target = $region25
  $region24: #{subgraph_gnn_forward.1} parent=0 // pred_region
    _
  $region25: #{subgraph_gnn_forward.1} parent=0 // pred_fallthru
    _
  // Predicated region
  $region26: #{subgraph_gnn_forward.1} parent=0 // pred_check
    _
  $region27: #{subgraph_gnn_forward.1} parent=0 // pred_check_branch
    %37 = sbr.rel (0) target = $region29
  $region28: #{subgraph_gnn_forward.1} parent=0 // pred_region
    _
  $region29: #{subgraph_gnn_forward.1} parent=0 // pred_fallthru
    _
  // Predicated region
  $region30: #{subgraph_gnn_forward.1} parent=0 // pred_check
    _
  $region31: #{subgraph_gnn_forward.1} parent=0 // pred_check_branch
    %39 = sbr.rel (0) target = $region33
  $region32: #{subgraph_gnn_forward.1} parent=0 // pred_region
    _
  $region33: #{subgraph_gnn_forward.1} parent=0 // pred_fallthru
    _
  // Predicated region
  $region34: #{subgraph_gnn_forward.1} parent=0 // pred_check
    _
  $region35: #{subgraph_gnn_forward.1} parent=0 // pred_check_branch
    %41 = sbr.rel (0) target = $region37
  $region36: #{subgraph_gnn_forward.1} parent=0 // pred_region
    _
  $region37: #{subgraph_gnn_forward.1} parent=0 // pred_fallthru
    _
  // Predicated region
  $region38: #{subgraph_gnn_forward.1} parent=0 // pred_check
    _
  $region39: #{subgraph_gnn_forward.1} parent=0 // pred_check_branch
    %43 = sbr.rel (0) target = $region41
  $region40: #{subgraph_gnn_forward.1} parent=0 // pred_region
    _
  $region41: #{subgraph_gnn_forward.1} parent=0 // pred_fallthru
    _
  // Predicated region
  $region42: #{subgraph_gnn_forward.1} parent=0 // pred_check
    _
  $region43: #{subgraph_gnn_forward.1} parent=0 // pred_check_branch
    %45 = sbr.rel (0) target = $region45
  $region44: #{subgraph_gnn_forward.1} parent=0 // pred_region
    _
  $region45: #{subgraph_gnn_forward.1} parent=0 // pred_fallthru
    _
  // Predicated region
  $region46: #{subgraph_gnn_forward.1} parent=0 // pred_check
    _
  $region47: #{subgraph_gnn_forward.1} parent=0 // pred_check_branch
    %47 = sbr.rel (0) target = $region49
  $region48: #{subgraph_gnn_forward.1} parent=0 // pred_region
    _
  $region49: #{subgraph_gnn_forward.1} parent=0 // pred_fallthru
    _
  // Predicated region
  $region50: #{subgraph_gnn_forward.1} parent=0 // pred_check
    _
  $region51: #{subgraph_gnn_forward.1} parent=0 // pred_check_branch
    %49 = sbr.rel (0) target = $region53
  $region52: #{subgraph_gnn_forward.1} parent=0 // pred_region
    _
  $region53: #{subgraph_gnn_forward.1} parent=0 // pred_fallthru
    _
  // Predicated region
  $region54: #{subgraph_gnn_forward.1} parent=0 // pred_check
    _
  $region55: #{subgraph_gnn_forward.1} parent=0 // pred_check_branch
    %51 = sbr.rel (0) target = $region57
  $region56: #{subgraph_gnn_forward.1} parent=0 // pred_region
    _
  $region57: #{subgraph_gnn_forward.1} parent=0 // pred_fallthru
    _
  // Predicated region
  $region58: #{subgraph_gnn_forward.1} parent=0 // pred_check
    _
  $region59: #{subgraph_gnn_forward.1} parent=0 // pred_check_branch
    %53 = sbr.rel (0) target = $region61
  $region60: #{subgraph_gnn_forward.1} parent=0 // pred_region
    _
  $region61: #{subgraph_gnn_forward.1} parent=0 // pred_fallthru
    _
  // Predicated region
  $region62: #{subgraph_gnn_forward.1} parent=0 // pred_check
    _
  $region63: #{subgraph_gnn_forward.1} parent=0 // pred_check_branch
    %55 = sbr.rel (0) target = $region65
  $region64: #{subgraph_gnn_forward.1} parent=0 // pred_region
    _
  $region65: #{subgraph_gnn_forward.1} parent=0 // pred_fallthru
    _
  // Predicated region
  $region66: #{subgraph_gnn_forward.1} parent=0 // pred_check
    _
  $region67: #{subgraph_gnn_forward.1} parent=0 // pred_check_branch
    %57 = sbr.rel (0) target = $region69
  $region68: #{subgraph_gnn_forward.1} parent=0 // pred_region
    _
  $region69: #{subgraph_gnn_forward.1} parent=0 // pred_fallthru
    _
  // Predicated region
  $region70: #{subgraph_gnn_forward.1} parent=0 // pred_check
    _
  $region71: #{subgraph_gnn_forward.1} parent=0 // pred_check_branch
    %59 = sbr.rel (0) target = $region73
  $region72: #{subgraph_gnn_forward.1} parent=0 // pred_region
    _
  $region73: #{subgraph_gnn_forward.1} parent=0 // pred_fallthru
    _
  // Predicated region
  $region74: #{subgraph_gnn_forward.1} parent=0 // pred_check
    _
  $region75: #{subgraph_gnn_forward.1} parent=0 // pred_check_branch
    %61 = sbr.rel (0) target = $region77
  $region76: #{subgraph_gnn_forward.1} parent=0 // pred_region
    _
  $region77: #{subgraph_gnn_forward.1} parent=0 // pred_fallthru
    _
  %v63 = vld [vmem:[%s1] sm:$0xf]
  %v64 = vld [vmem:[%s1 + $0x4] sm:$0xf]
  %v65 = vld [vmem:[%s1 + $0x8] sm:$0xf]
  %v66 = vld [vmem:[%s1 + $0xc] sm:$0xf]
  %v67 = vld [vmem:[%s1 + $0x10] sm:$0xf]
  %v68 = vld [vmem:[%s1 + $0x14] sm:$0xf]
  %v69 = vld [vmem:[%s1 + $0x18] sm:$0xf]
  %v70 = vld [vmem:[%s1 + $0x1c] sm:$0xf]
  %v71 = vld [vmem:[%s1 + $0x20] sm:$0xf]
  %v72 = vld [vmem:[%s1 + $0x24] sm:$0xf]
  %v73 = vld [vmem:[%s1 + $0x28] sm:$0xf]
  %v74 = vld [vmem:[%s1 + $0x2c] sm:$0xf]
  %v75 = vld [vmem:[%s1 + $0x30] sm:$0xf]
  %v76 = vld [vmem:[%s1 + $0x34] sm:$0xf]
  %v77 = vld [vmem:[%s1 + $0x38] sm:$0xf]
  %v78 = vld [vmem:[%s1 + $0x3c] sm:$0xf]
  %v79 = vld [vmem:[%s1 + $0x40] sm:$0xf]
  %v80 = vld [vmem:[%s1 + $0x44] sm:$0xf]
  %v81 = vld [vmem:[%s1 + $0x48] sm:$0xf]
  %v82 = vld [vmem:[%s1 + $0x4c] sm:$0xf]
  %v83 = vld [vmem:[%s1 + $0x50] sm:$0xf]
  %v84 = vld [vmem:[%s1 + $0x54] sm:$0xf]
  %v85 = vld [vmem:[%s1 + $0x58] sm:$0xf]
  %v86 = vld [vmem:[%s1 + $0x5c] sm:$0xf]
  %v87 = vld [vmem:[%s1 + $0x60] sm:$0xf]
  %v88 = vld [vmem:[%s1 + $0x64] sm:$0xf]
  %v89 = vld [vmem:[%s1 + $0x68] sm:$0xf]
  %v90 = vld [vmem:[%s1 + $0x6c] sm:$0xf]
  %v91 = vld [vmem:[%s1 + $0x70] sm:$0xf]
  %v92 = vld [vmem:[%s1 + $0x74] sm:$0xf]
  %v93 = vld [vmem:[%s1 + $0x78] sm:$0xf]
  %v94 = vld [vmem:[%s1 + $0x7c] sm:$0xf]
  %v95 = vld [vmem:[%s1 + $0x80] sm:$0xf]
  %v96 = vld [vmem:[%s1 + $0x84] sm:$0xf]
  %v97 = vld [vmem:[%s1 + $0x88] sm:$0xf]
  %v98 = vld [vmem:[%s1 + $0x8c] sm:$0xf]
  %v99 = vld [vmem:[%s1 + $0x90] sm:$0xf]
  %v100 = vld [vmem:[%s1 + $0x94] sm:$0xf]
  %v101 = vld [vmem:[%s1 + $0x98] sm:$0xf]
  %v102 = vld [vmem:[%s1 + $0x9c] sm:$0xf]
  %v103 = vld [vmem:[%s1 + $0xa0] sm:$0xf]
  %v104 = vld [vmem:[%s1 + $0xa4] sm:$0xf]
  %v105 = vld [vmem:[%s1 + $0xa8] sm:$0xf]
  %v106 = vld [vmem:[%s1 + $0xac] sm:$0xf]
  %v107 = vld [vmem:[%s1 + $0xb0] sm:$0xf]
  %v108 = vld [vmem:[%s1 + $0xb4] sm:$0xf]
  %v109 = vld [vmem:[%s1 + $0xb8] sm:$0xf]
  %v110 = vld [vmem:[%s1 + $0xbc] sm:$0xf]
  %v111 = vld [vmem:[%s0] sm:$0xf]
  %v112 = vld [vmem:[%s0 + $0x4] sm:$0xf]
  %v113 = vld [vmem:[%s0 + $0x8] sm:$0xf]
  %v114 = vld [vmem:[%s0 + $0xc] sm:$0xf]
  %v115 = vld [vmem:[%s0 + $0x10] sm:$0xf]
  %v116 = vld [vmem:[%s0 + $0x14] sm:$0xf]
  %v117 = vld [vmem:[%s0 + $0x18] sm:$0xf]
  %v118 = vld [vmem:[%s0 + $0x1c] sm:$0xf]
  %v119 = vld [vmem:[%s0 + $0x20] sm:$0xf]
  %v120 = vld [vmem:[%s0 + $0x24] sm:$0xf]
  %v121 = vld [vmem:[%s0 + $0x28] sm:$0xf]
  %v122 = vld [vmem:[%s0 + $0x2c] sm:$0xf]
  %v123 = vld [vmem:[%s0 + $0x30] sm:$0xf]
  %v124 = vld [vmem:[%s0 + $0x34] sm:$0xf]
  %v125 = vld [vmem:[%s0 + $0x38] sm:$0xf]
  %v126 = vld [vmem:[%s0 + $0x3c] sm:$0xf]
  %v175 = vunpack.c.l.b16 %v63
  %v176 = vunpack.c.l.b16 %v64
  %v177 = vunpack.c.l.b16 %v65
  %v178 = vunpack.c.l.b16 %v66
  %v179 = vunpack.c.l.b16 %v67
  %v180 = vunpack.c.l.b16 %v68
  %v181 = vunpack.c.l.b16 %v69
  %v182 = vunpack.c.l.b16 %v70
  %v183 = vunpack.c.l.b16 %v71
  %v184 = vunpack.c.l.b16 %v72
  %v185 = vunpack.c.l.b16 %v73
  %v186 = vunpack.c.l.b16 %v74
  %v187 = vunpack.c.l.b16 %v75
  %v188 = vunpack.c.l.b16 %v76
  %v189 = vunpack.c.l.b16 %v77
  %v190 = vunpack.c.l.b16 %v78
  %v191 = vunpack.c.l.b16 %v79
  %v192 = vunpack.c.l.b16 %v80
  %v193 = vunpack.c.l.b16 %v81
  %v194 = vunpack.c.l.b16 %v82
  %v195 = vunpack.c.l.b16 %v83
  %v196 = vunpack.c.l.b16 %v84
  %v197 = vunpack.c.l.b16 %v85
  %v198 = vunpack.c.l.b16 %v86
  %v199 = vunpack.c.l.b16 %v87
  %v200 = vunpack.c.l.b16 %v88
  %v201 = vunpack.c.l.b16 %v89
  %v202 = vunpack.c.l.b16 %v90
  %v203 = vunpack.c.l.b16 %v91
  %v204 = vunpack.c.l.b16 %v92
  %v205 = vunpack.c.l.b16 %v93
  %v206 = vunpack.c.l.b16 %v94
  %v207 = vunpack.c.l.b16 %v95
  %v208 = vunpack.c.l.b16 %v96
  %v209 = vunpack.c.l.b16 %v97
  %v210 = vunpack.c.l.b16 %v98
  %v211 = vunpack.c.l.b16 %v99
  %v212 = vunpack.c.l.b16 %v100
  %v213 = vunpack.c.l.b16 %v101
  %v214 = vunpack.c.l.b16 %v102
  %v215 = vunpack.c.l.b16 %v103
  %v216 = vunpack.c.l.b16 %v104
  %v217 = vunpack.c.l.b16 %v105
  %v218 = vunpack.c.l.b16 %v106
  %v219 = vunpack.c.l.b16 %v107
  %v220 = vunpack.c.l.b16 %v108
  %v221 = vunpack.c.l.b16 %v109
  %v222 = vunpack.c.l.b16 %v110
  %v223 = vpack.c.b16 %v176, %v175
  %v224 = vpack.c.b16 %v178, %v177
  %v225 = vpack.c.b16 %v180, %v179
  %v226 = vpack.c.b16 %v182, %v181
  %v227 = vpack.c.b16 %v184, %v183
  %v228 = vpack.c.b16 %v186, %v185
  %v229 = vpack.c.b16 %v188, %v187
  %v230 = vpack.c.b16 %v190, %v189
  %v231 = vpack.c.b16 %v192, %v191
  %v232 = vpack.c.b16 %v194, %v193
  %v233 = vpack.c.b16 %v196, %v195
  %v234 = vpack.c.b16 %v198, %v197
  %v235 = vpack.c.b16 %v200, %v199
  %v236 = vpack.c.b16 %v202, %v201
  %v237 = vpack.c.b16 %v204, %v203
  %v238 = vpack.c.b16 %v206, %v205
  %v239 = vpack.c.b16 %v208, %v207
  %v240 = vpack.c.b16 %v210, %v209
  %v241 = vpack.c.b16 %v212, %v211
  %v242 = vpack.c.b16 %v214, %v213
  %v243 = vpack.c.b16 %v216, %v215
  %v244 = vpack.c.b16 %v218, %v217
  %v245 = vpack.c.b16 %v220, %v219
  %v246 = vpack.c.b16 %v222, %v221
  %v287 = vunpack.c.l.b16 %v111
  %v288 = vunpack.c.l.b16 %v112
  %v289 = vunpack.c.l.b16 %v113
  %v290 = vunpack.c.l.b16 %v114
  %v291 = vunpack.c.l.b16 %v115
  %v292 = vunpack.c.l.b16 %v116
  %v293 = vunpack.c.l.b16 %v117
  %v294 = vunpack.c.l.b16 %v118
  %v295 = vunpack.c.l.b16 %v119
  %v296 = vunpack.c.l.b16 %v120
  %v297 = vunpack.c.l.b16 %v121
  %v298 = vunpack.c.l.b16 %v122
  %v299 = vunpack.c.l.b16 %v123
  %v300 = vunpack.c.l.b16 %v124
  %v301 = vunpack.c.l.b16 %v125
  %v302 = vunpack.c.l.b16 %v126
  %v303 = vpack.c.b16 %v288, %v287
  %v304 = vpack.c.b16 %v290, %v289
  %v305 = vpack.c.b16 %v292, %v291
  %v306 = vpack.c.b16 %v294, %v293
  %v307 = vpack.c.b16 %v296, %v295
  %v308 = vpack.c.b16 %v298, %v297
  %v309 = vpack.c.b16 %v300, %v299
  %v310 = vpack.c.b16 %v302, %v301
  %319 = vmatprep.subr.bf16.mxu0 0
  %320 = vmatpush1.bf16.msra.mxu0 %v303
  %321 = vmatprep.subr.bf16.mxu0 0
  %322 = vmatpush1.bf16.msra.mxu0 %v304
  %323 = vmatprep.subr.bf16.mxu0 0
  %324 = vmatpush1.bf16.msra.mxu0 %v305
  %325 = vmatprep.subr.bf16.mxu0 0
  %326 = vmatpush1.bf16.msra.mxu0 %v306
  %327 = vmatprep.subr.bf16.mxu0 0
  %328 = vmatpush1.bf16.msra.mxu0 %v307
  %329 = vmatprep.subr.bf16.mxu0 0
  %330 = vmatpush1.bf16.msra.mxu0 %v308
  %331 = vmatprep.subr.bf16.mxu0 0
  %332 = vmatpush1.bf16.msra.mxu0 %v309
  %333 = vmatprep.subr.bf16.mxu0 0
  %334 = vmatpush1.bf16.msra.mxu0 %v310
  %335 = vmatprep.subr.bf16.mxu0 0
  %336 = vmatpush1.bf16.msra.mxu0 0
  %337 = vmatprep.subr.bf16.mxu0 0
  %338 = vmatpush1.bf16.msra.mxu0 0
  %339 = vmatprep.subr.bf16.mxu0 0
  %340 = vmatpush1.bf16.msra.mxu0 0
  %341 = vmatprep.subr.bf16.mxu0 0
  %342 = vmatpush1.bf16.msra.mxu0 0
  %343 = vmatprep.subr.bf16.mxu0 0
  %344 = vmatpush1.bf16.msra.mxu0 0
  %345 = vmatprep.subr.bf16.mxu0 0
  %346 = vmatpush1.bf16.msra.mxu0 0
  %347 = vmatprep.subr.bf16.mxu0 0
  %348 = vmatpush1.bf16.msra.mxu0 0
  %349 = vmatprep.subr.bf16.mxu0 0
  %350 = vmatpush1.bf16.msra.mxu0 0
  %351 = vmatprep.mubr.bf16.mxu0 0
  %352 = vmatmul.mubr.bf16.gmra.mrb[0].mxu0 %v223
  %v353 = vpop.f32.mrb[0].mxu0
  %v354 = vadd.f32 0.0, %v353
  %v355 = vpop.f32.mrb[0].mxu0
  %v356 = vpop.f32.mrb[0].mxu0
  %v357 = vadd.f32 0.0, %v356
  %v358 = vpop.f32.mrb[0].mxu0
  %359 = vmatprep.mubr.bf16.mxu0 0
  %360 = vmatmul.mubr.bf16.gmra.mrb[0].mxu0 %v224
  %v361 = vpop.f32.mrb[0].mxu0
  %v362 = vadd.f32 0.0, %v361
  %v363 = vpop.f32.mrb[0].mxu0
  %v364 = vpop.f32.mrb[0].mxu0
  %v365 = vadd.f32 0.0, %v364
  %v366 = vpop.f32.mrb[0].mxu0
  %367 = vmatprep.mubr.bf16.mxu0 0
  %368 = vmatmul.mubr.bf16.gmra.mrb[0].mxu0 %v225
  %v369 = vpop.f32.mrb[0].mxu0
  %v370 = vadd.f32 0.0, %v369
  %v371 = vpop.f32.mrb[0].mxu0
  %v372 = vpop.f32.mrb[0].mxu0
  %v373 = vadd.f32 0.0, %v372
  %v374 = vpop.f32.mrb[0].mxu0
  %375 = vmatprep.mubr.bf16.mxu0 0
  %376 = vmatmul.mubr.bf16.gmra.mrb[0].mxu0 %v226
  %v377 = vpop.f32.mrb[0].mxu0
  %v378 = vadd.f32 0.0, %v377
  %v379 = vpop.f32.mrb[0].mxu0
  %v380 = vpop.f32.mrb[0].mxu0
  %v381 = vadd.f32 0.0, %v380
  %v382 = vpop.f32.mrb[0].mxu0
  %383 = vmatprep.mubr.bf16.mxu0 0
  %384 = vmatmul.mubr.bf16.gmra.mrb[0].mxu0 %v227
  %v385 = vpop.f32.mrb[0].mxu0
  %v386 = vadd.f32 0.0, %v385
  %v387 = vpop.f32.mrb[0].mxu0
  %v388 = vpop.f32.mrb[0].mxu0
  %v389 = vadd.f32 0.0, %v388
  %v390 = vpop.f32.mrb[0].mxu0
  %391 = vmatprep.mubr.bf16.mxu0 0
  %392 = vmatmul.mubr.bf16.gmra.mrb[0].mxu0 %v228
  %v393 = vpop.f32.mrb[0].mxu0
  %v394 = vadd.f32 0.0, %v393
  %v395 = vpop.f32.mrb[0].mxu0
  %v396 = vpop.f32.mrb[0].mxu0
  %v397 = vadd.f32 0.0, %v396
  %v398 = vpop.f32.mrb[0].mxu0
  %399 = vmatprep.mubr.bf16.mxu0 0
  %400 = vmatmul.mubr.bf16.gmra.mrb[0].mxu0 %v229
  %v401 = vpop.f32.mrb[0].mxu0
  %v402 = vadd.f32 0.0, %v401
  %v403 = vpop.f32.mrb[0].mxu0
  %v404 = vpop.f32.mrb[0].mxu0
  %v405 = vadd.f32 0.0, %v404
  %v406 = vpop.f32.mrb[0].mxu0
  %407 = vmatprep.mubr.bf16.mxu0 0
  %408 = vmatmul.mubr.bf16.gmra.mrb[0].mxu0 %v230
  %v409 = vpop.f32.mrb[0].mxu0
  %v410 = vadd.f32 0.0, %v409
  %v411 = vpop.f32.mrb[0].mxu0
  %v412 = vpop.f32.mrb[0].mxu0
  %v413 = vadd.f32 0.0, %v412
  %v414 = vpop.f32.mrb[0].mxu0
  %415 = vmatprep.mubr.bf16.mxu0 0
  %416 = vmatmul.mubr.bf16.gmra.mrb[0].mxu0 %v231
  %v417 = vpop.f32.mrb[0].mxu0
  %v418 = vadd.f32 0.0, %v417
  %v419 = vpop.f32.mrb[0].mxu0
  %v420 = vpop.f32.mrb[0].mxu0
  %v421 = vadd.f32 0.0, %v420
  %v422 = vpop.f32.mrb[0].mxu0
  %423 = vmatprep.mubr.bf16.mxu0 0
  %424 = vmatmul.mubr.bf16.gmra.mrb[0].mxu0 %v232
  %v425 = vpop.f32.mrb[0].mxu0
  %v426 = vadd.f32 0.0, %v425
  %v427 = vpop.f32.mrb[0].mxu0
  %v428 = vpop.f32.mrb[0].mxu0
  %v429 = vadd.f32 0.0, %v428
  %v430 = vpop.f32.mrb[0].mxu0
  %431 = vmatprep.mubr.bf16.mxu0 0
  %432 = vmatmul.mubr.bf16.gmra.mrb[0].mxu0 %v233
  %v433 = vpop.f32.mrb[0].mxu0
  %v434 = vadd.f32 0.0, %v433
  %v435 = vpop.f32.mrb[0].mxu0
  %v436 = vpop.f32.mrb[0].mxu0
  %v437 = vadd.f32 0.0, %v436
  %v438 = vpop.f32.mrb[0].mxu0
  %439 = vmatprep.mubr.bf16.mxu0 0
  %440 = vmatmul.mubr.bf16.gmra.mrb[0].mxu0 %v234
  %v441 = vpop.f32.mrb[0].mxu0
  %v442 = vadd.f32 0.0, %v441
  %v443 = vpop.f32.mrb[0].mxu0
  %v444 = vpop.f32.mrb[0].mxu0
  %v445 = vadd.f32 0.0, %v444
  %v446 = vpop.f32.mrb[0].mxu0
  %447 = vmatprep.mubr.bf16.mxu0 0
  %448 = vmatmul.mubr.bf16.gmra.mrb[0].mxu0 %v235
  %v449 = vpop.f32.mrb[0].mxu0
  %v450 = vadd.f32 0.0, %v449
  %v451 = vpop.f32.mrb[0].mxu0
  %v452 = vpop.f32.mrb[0].mxu0
  %v453 = vadd.f32 0.0, %v452
  %v454 = vpop.f32.mrb[0].mxu0
  %455 = vmatprep.mubr.bf16.mxu0 0
  %456 = vmatmul.mubr.bf16.gmra.mrb[0].mxu0 %v236
  %v457 = vpop.f32.mrb[0].mxu0
  %v458 = vadd.f32 0.0, %v457
  %v459 = vpop.f32.mrb[0].mxu0
  %v460 = vpop.f32.mrb[0].mxu0
  %v461 = vadd.f32 0.0, %v460
  %v462 = vpop.f32.mrb[0].mxu0
  %463 = vmatprep.mubr.bf16.mxu0 0
  %464 = vmatmul.mubr.bf16.gmra.mrb[0].mxu0 %v237
  %v465 = vpop.f32.mrb[0].mxu0
  %v466 = vadd.f32 0.0, %v465
  %v467 = vpop.f32.mrb[0].mxu0
  %v468 = vpop.f32.mrb[0].mxu0
  %v469 = vadd.f32 0.0, %v468
  %v470 = vpop.f32.mrb[0].mxu0
  %471 = vmatprep.mubr.bf16.mxu0 0
  %472 = vmatmul.mubr.bf16.gmra.mrb[0].mxu0 %v238
  %v473 = vpop.f32.mrb[0].mxu0
  %v474 = vadd.f32 0.0, %v473
  %v475 = vpop.f32.mrb[0].mxu0
  %v476 = vpop.f32.mrb[0].mxu0
  %v477 = vadd.f32 0.0, %v476
  %v478 = vpop.f32.mrb[0].mxu0
  %479 = vmatprep.mubr.bf16.mxu0 0
  %480 = vmatmul.mubr.bf16.gmra.mrb[0].mxu0 %v239
  %v481 = vpop.f32.mrb[0].mxu0
  %v482 = vadd.f32 0.0, %v481
  %v483 = vpop.f32.mrb[0].mxu0
  %v484 = vpop.f32.mrb[0].mxu0
  %v485 = vadd.f32 0.0, %v484
  %v486 = vpop.f32.mrb[0].mxu0
  %487 = vmatprep.mubr.bf16.mxu0 0
  %488 = vmatmul.mubr.bf16.gmra.mrb[0].mxu0 %v240
  %v489 = vpop.f32.mrb[0].mxu0
  %v490 = vadd.f32 0.0, %v489
  %v491 = vpop.f32.mrb[0].mxu0
  %v492 = vpop.f32.mrb[0].mxu0
  %v493 = vadd.f32 0.0, %v492
  %v494 = vpop.f32.mrb[0].mxu0
  %495 = vmatprep.mubr.bf16.mxu0 0
  %496 = vmatmul.mubr.bf16.gmra.mrb[0].mxu0 %v241
  %v497 = vpop.f32.mrb[0].mxu0
  %v498 = vadd.f32 0.0, %v497
  %v499 = vpop.f32.mrb[0].mxu0
  %v500 = vpop.f32.mrb[0].mxu0
  %v501 = vadd.f32 0.0, %v500
  %v502 = vpop.f32.mrb[0].mxu0
  %503 = vmatprep.mubr.bf16.mxu0 0
  %504 = vmatmul.mubr.bf16.gmra.mrb[0].mxu0 %v242
  %v505 = vpop.f32.mrb[0].mxu0
  %v506 = vadd.f32 0.0, %v505
  %v507 = vpop.f32.mrb[0].mxu0
  %v508 = vpop.f32.mrb[0].mxu0
  %v509 = vadd.f32 0.0, %v508
  %v510 = vpop.f32.mrb[0].mxu0
  %511 = vmatprep.mubr.bf16.mxu0 0
  %512 = vmatmul.mubr.bf16.gmra.mrb[0].mxu0 %v243
  %v513 = vpop.f32.mrb[0].mxu0
  %v514 = vadd.f32 0.0, %v513
  %v515 = vpop.f32.mrb[0].mxu0
  %v516 = vpop.f32.mrb[0].mxu0
  %v517 = vadd.f32 0.0, %v516
  %v518 = vpop.f32.mrb[0].mxu0
  %519 = vmatprep.mubr.bf16.mxu0 0
  %520 = vmatmul.mubr.bf16.gmra.mrb[0].mxu0 %v244
  %v521 = vpop.f32.mrb[0].mxu0
  %v522 = vadd.f32 0.0, %v521
  %v523 = vpop.f32.mrb[0].mxu0
  %v524 = vpop.f32.mrb[0].mxu0
  %v525 = vadd.f32 0.0, %v524
  %v526 = vpop.f32.mrb[0].mxu0
  %527 = vmatprep.mubr.bf16.mxu0 0
  %528 = vmatmul.mubr.bf16.gmra.mrb[0].mxu0 %v245
  %v529 = vpop.f32.mrb[0].mxu0
  %v530 = vadd.f32 0.0, %v529
  %v531 = vpop.f32.mrb[0].mxu0
  %v532 = vpop.f32.mrb[0].mxu0
  %v533 = vadd.f32 0.0, %v532
  %v534 = vpop.f32.mrb[0].mxu0
  %535 = vmatprep.mubr.bf16.mxu0 0
  %536 = vmatmul.mubr.bf16.gmra.mrb[0].mxu0 %v246
  %v537 = vpop.f32.mrb[0].mxu0
  %v538 = vadd.f32 0.0, %v537
  %v539 = vpop.f32.mrb[0].mxu0
  %v540 = vpop.f32.mrb[0].mxu0
  %v541 = vadd.f32 0.0, %v540
  %v542 = vpop.f32.mrb[0].mxu0
  %543 = vdwg.mxu0
  %v544 = vld [vmem:[%s2] sm:$0xff]
  %v545 = vld [vmem:[%s2 + $0x8] sm:$0xff]
  %v546 = vld [vmem:[%s2 + $0x10] sm:$0xff]
  %v547 = vld [vmem:[%s2 + $0x18] sm:$0xff]
  %v548 = vld [vmem:[%s2 + $0x20] sm:$0xff]
  %v549 = vld [vmem:[%s2 + $0x28] sm:$0xff]
  %v550 = vld [vmem:[%s2 + $0x30] sm:$0xff]
  %v551 = vld [vmem:[%s2 + $0x38] sm:$0xff]
  %v552 = vld [vmem:[%s2 + $0x40] sm:$0xff]
  %v553 = vld [vmem:[%s2 + $0x48] sm:$0xff]
  %v554 = vld [vmem:[%s2 + $0x50] sm:$0xff]
  %v555 = vld [vmem:[%s2 + $0x58] sm:$0xff]
  %v556 = vld [vmem:[%s2 + $0x60] sm:$0xff]
  %v557 = vld [vmem:[%s2 + $0x68] sm:$0xff]
  %v558 = vld [vmem:[%s2 + $0x70] sm:$0xff]
  %v559 = vld [vmem:[%s2 + $0x78] sm:$0xff]
  %v560 = vld [vmem:[%s3] sm:$0xff]
  %v561 = vld [vmem:[%s3 + $0x8] sm:$0xff]
  %v562 = vld [vmem:[%s3 + $0x10] sm:$0xff]
  %v563 = vld [vmem:[%s3 + $0x18] sm:$0xff]
  %v564 = vld [vmem:[%s3 + $0x20] sm:$0xff]
  %v565 = vld [vmem:[%s3 + $0x28] sm:$0xff]
  %v566 = vld [vmem:[%s3 + $0x30] sm:$0xff]
  %v567 = vld [vmem:[%s3 + $0x38] sm:$0xff]
  %v568 = vld [vmem:[%s3 + $0x40] sm:$0xff]
  %v569 = vld [vmem:[%s3 + $0x48] sm:$0xff]
  %v570 = vld [vmem:[%s3 + $0x50] sm:$0xff]
  %v571 = vld [vmem:[%s3 + $0x58] sm:$0xff]
  %v572 = vld [vmem:[%s3 + $0x60] sm:$0xff]
  %v573 = vld [vmem:[%s3 + $0x68] sm:$0xff]
  %v574 = vld [vmem:[%s3 + $0x70] sm:$0xff]
  %v575 = vld [vmem:[%s3 + $0x78] sm:$0xff]
  %v576 = vld [vmem:[%s4] sm:$0x1]
  %v578 = vlaneseq
  %v579 = vshrl.u32 %v578, 7
  %v580 = vsub.s32 0, %v579
  %v581 = vrot.slane %v576, %v580
  %583 = vmatprep.subr.mxu0 0.0
  %584 = vmatpush1.msra.mxu0 %v560
  %585 = vmatprep.subr.mxu0 0.0
  %586 = vmatpush1.msra.mxu0 %v561
  %587 = vmatprep.subr.mxu0 0.0
  %588 = vmatpush1.msra.mxu0 %v562
  %589 = vmatprep.subr.mxu0 0.0
  %590 = vmatpush1.msra.mxu0 %v563
  %591 = vmatprep.subr.mxu0 0.0
  %592 = vmatpush1.msra.mxu0 %v564
  %593 = vmatprep.subr.mxu0 0.0
  %594 = vmatpush1.msra.mxu0 %v565
  %595 = vmatprep.subr.mxu0 0.0
  %596 = vmatpush1.msra.mxu0 %v566
  %597 = vmatprep.subr.mxu0 0.0
  %598 = vmatpush1.msra.mxu0 %v567
  %599 = vmatprep.subr.mxu0 0.0
  %600 = vmatpush1.msra.mxu0 %v568
  %601 = vmatprep.subr.mxu0 0.0
  %602 = vmatpush1.msra.mxu0 %v569
  %603 = vmatprep.subr.mxu0 0.0
  %604 = vmatpush1.msra.mxu0 %v570
  %605 = vmatprep.subr.mxu0 0.0
  %606 = vmatpush1.msra.mxu0 %v571
  %607 = vmatprep.subr.mxu0 0.0
  %608 = vmatpush1.msra.mxu0 %v572
  %609 = vmatprep.subr.mxu0 0.0
  %610 = vmatpush1.msra.mxu0 %v573
  %611 = vmatprep.subr.mxu0 0.0
  %612 = vmatpush1.msra.mxu0 %v574
  %613 = vmatprep.subr.mxu0 0.0
  %614 = vmatpush1.msra.mxu0 %v575
  %615 = vmatprep.subr.mxu0 0.0
  %616 = vmatpush1.msra.mxu0 0.0
  %617 = vmatprep.subr.mxu0 0.0
  %618 = vmatpush1.msra.mxu0 0.0
  %619 = vmatprep.subr.mxu0 0.0
  %620 = vmatpush1.msra.mxu0 0.0
  %621 = vmatprep.subr.mxu0 0.0
  %622 = vmatpush1.msra.mxu0 0.0
  %623 = vmatprep.subr.mxu0 0.0
  %624 = vmatpush1.msra.mxu0 0.0
  %625 = vmatprep.subr.mxu0 0.0
  %626 = vmatpush1.msra.mxu0 0.0
  %627 = vmatprep.subr.mxu0 0.0
  %628 = vmatpush1.msra.mxu0 0.0
  %629 = vmatprep.subr.mxu0 0.0
  %630 = vmatpush1.msra.mxu0 0.0
  %631 = vmatprep.subr.mxu0 0.0
  %632 = vmatpush1.msra.mxu0 0.0
  %633 = vmatprep.subr.mxu0 0.0
  %634 = vmatpush1.msra.mxu0 0.0
  %635 = vmatprep.subr.mxu0 0.0
  %636 = vmatpush1.msra.mxu0 0.0
  %637 = vmatprep.subr.mxu0 0.0
  %638 = vmatpush1.msra.mxu0 0.0
  %639 = vmatprep.subr.mxu0 0.0
  %640 = vmatpush1.msra.mxu0 0.0
  %641 = vmatprep.subr.mxu0 0.0
  %642 = vmatpush1.msra.mxu0 0.0
  %643 = vmatprep.subr.mxu0 0.0
  %644 = vmatpush1.msra.mxu0 0.0
  %645 = vmatprep.subr.mxu0 0.0
  %646 = vmatpush1.msra.mxu0 0.0
  %647 = vmatprep.mubr.f32.mxu0 0.0
  %648 = vmatmul.mubr.f32.gmra.mrb[0].mxu0 %v544
  %v649 = vpop.f32.mrb[0].mxu0
  %v650 = vadd.f32 %v581, %v649
  %v651 = vpop.f32.mrb[0].mxu0
  %652 = vmatprep.mubr.f32.mxu0 0.0
  %653 = vmatmul.mubr.f32.gmra.mrb[0].mxu0 %v545
  %v654 = vpop.f32.mrb[0].mxu0
  %v655 = vadd.f32 %v581, %v654
  %v656 = vpop.f32.mrb[0].mxu0
  %657 = vmatprep.mubr.f32.mxu0 0.0
  %658 = vmatmul.mubr.f32.gmra.mrb[0].mxu0 %v546
  %v659 = vpop.f32.mrb[0].mxu0
  %v660 = vadd.f32 %v581, %v659
  %v661 = vpop.f32.mrb[0].mxu0
  %662 = vmatprep.mubr.f32.mxu0 0.0
  %663 = vmatmul.mubr.f32.gmra.mrb[0].mxu0 %v547
  %v664 = vpop.f32.mrb[0].mxu0
  %v665 = vadd.f32 %v581, %v664
  %v666 = vpop.f32.mrb[0].mxu0
  %667 = vmatprep.mubr.f32.mxu0 0.0
  %668 = vmatmul.mubr.f32.gmra.mrb[0].mxu0 %v548
  %v669 = vpop.f32.mrb[0].mxu0
  %v670 = vadd.f32 %v581, %v669
  %v671 = vpop.f32.mrb[0].mxu0
  %672 = vmatprep.mubr.f32.mxu0 0.0
  %673 = vmatmul.mubr.f32.gmra.mrb[0].mxu0 %v549
  %v674 = vpop.f32.mrb[0].mxu0
  %v675 = vadd.f32 %v581, %v674
  %v676 = vpop.f32.mrb[0].mxu0
  %677 = vmatprep.mubr.f32.mxu0 0.0
  %678 = vmatmul.mubr.f32.gmra.mrb[0].mxu0 %v550
  %v679 = vpop.f32.mrb[0].mxu0
  %v680 = vadd.f32 %v581, %v679
  %v681 = vpop.f32.mrb[0].mxu0
  %682 = vmatprep.mubr.f32.mxu0 0.0
  %683 = vmatmul.mubr.f32.gmra.mrb[0].mxu0 %v551
  %v684 = vpop.f32.mrb[0].mxu0
  %v685 = vadd.f32 %v581, %v684
  %v686 = vpop.f32.mrb[0].mxu0
  %687 = vmatprep.mubr.f32.mxu0 0.0
  %688 = vmatmul.mubr.f32.gmra.mrb[0].mxu0 %v552
  %v689 = vpop.f32.mrb[0].mxu0
  %v690 = vadd.f32 %v581, %v689
  %v691 = vpop.f32.mrb[0].mxu0
  %692 = vmatprep.mubr.f32.mxu0 0.0
  %693 = vmatmul.mubr.f32.gmra.mrb[0].mxu0 %v553
  %v694 = vpop.f32.mrb[0].mxu0
  %v695 = vadd.f32 %v581, %v694
  %v696 = vpop.f32.mrb[0].mxu0
  %697 = vmatprep.mubr.f32.mxu0 0.0
  %698 = vmatmul.mubr.f32.gmra.mrb[0].mxu0 %v554
  %v699 = vpop.f32.mrb[0].mxu0
  %v700 = vadd.f32 %v581, %v699
  %v701 = vpop.f32.mrb[0].mxu0
  %702 = vmatprep.mubr.f32.mxu0 0.0
  %703 = vmatmul.mubr.f32.gmra.mrb[0].mxu0 %v555
  %v704 = vpop.f32.mrb[0].mxu0
  %v705 = vadd.f32 %v581, %v704
  %v706 = vpop.f32.mrb[0].mxu0
  %707 = vmatprep.mubr.f32.mxu0 0.0
  %708 = vmatmul.mubr.f32.gmra.mrb[0].mxu0 %v556
  %v709 = vpop.f32.mrb[0].mxu0
  %v710 = vadd.f32 %v581, %v709
  %v711 = vpop.f32.mrb[0].mxu0
  %712 = vmatprep.mubr.f32.mxu0 0.0
  %713 = vmatmul.mubr.f32.gmra.mrb[0].mxu0 %v557
  %v714 = vpop.f32.mrb[0].mxu0
  %v715 = vadd.f32 %v581, %v714
  %v716 = vpop.f32.mrb[0].mxu0
  %717 = vmatprep.mubr.f32.mxu0 0.0
  %718 = vmatmul.mubr.f32.gmra.mrb[0].mxu0 %v558
  %v719 = vpop.f32.mrb[0].mxu0
  %v720 = vadd.f32 %v581, %v719
  %v721 = vpop.f32.mrb[0].mxu0
  %722 = vmatprep.mubr.f32.mxu0 0.0
  %723 = vmatmul.mubr.f32.gmra.mrb[0].mxu0 %v559
  %v724 = vpop.f32.mrb[0].mxu0
  %v725 = vadd.f32 %v581, %v724
  %v726 = vpop.f32.mrb[0].mxu0
  %727 = vdwg.mxu0
  %v728 = vmax.f32 %v650, 0.0
  %v729 = vmax.f32 %v655, 0.0
  %v730 = vmax.f32 %v660, 0.0
  %v731 = vmax.f32 %v665, 0.0
  %v732 = vmax.f32 %v670, 0.0
  %v733 = vmax.f32 %v675, 0.0
  %v734 = vmax.f32 %v680, 0.0
  %v735 = vmax.f32 %v685, 0.0
  %v736 = vmax.f32 %v690, 0.0
  %v737 = vmax.f32 %v695, 0.0
  %v738 = vmax.f32 %v700, 0.0
  %v739 = vmax.f32 %v705, 0.0
  %v740 = vmax.f32 %v710, 0.0
  %v741 = vmax.f32 %v715, 0.0
  %v742 = vmax.f32 %v720, 0.0
  %v743 = vmax.f32 %v725, 0.0
  %v744 = vld [vmem:[%s5] sm:$0xff]
  %v745 = vld [vmem:[%s5 + $0x8] sm:$0xff]
  %v746 = vld [vmem:[%s5 + $0x10] sm:$0xff]
  %v747 = vld [vmem:[%s5 + $0x18] sm:$0xff]
  %v748 = vld [vmem:[%s5 + $0x20] sm:$0xff]
  %v749 = vld [vmem:[%s5 + $0x28] sm:$0xff]
  %v750 = vld [vmem:[%s5 + $0x30] sm:$0xff]
  %v751 = vld [vmem:[%s5 + $0x38] sm:$0xff]
  %v752 = vld [vmem:[%s5 + $0x40] sm:$0xff]
  %v753 = vld [vmem:[%s5 + $0x48] sm:$0xff]
  %v754 = vld [vmem:[%s5 + $0x50] sm:$0xff]
  %v755 = vld [vmem:[%s5 + $0x58] sm:$0xff]
  %v756 = vld [vmem:[%s5 + $0x60] sm:$0xff]
  %v757 = vld [vmem:[%s5 + $0x68] sm:$0xff]
  %v758 = vld [vmem:[%s5 + $0x70] sm:$0xff]
  %v759 = vld [vmem:[%s5 + $0x78] sm:$0xff]
  %v760 = vld [vmem:[%s6] sm:$0x1]
  %v762 = vlaneseq
  %v763 = vshrl.u32 %v762, 7
  %v764 = vsub.s32 0, %v763
  %v765 = vrot.slane %v760, %v764
  %767 = vmatprep.subr.mxu0 0.0
  %768 = vmatpush1.msra.mxu0 %v744
  %769 = vmatprep.subr.mxu0 0.0
  %770 = vmatpush1.msra.mxu0 %v745
  %771 = vmatprep.subr.mxu0 0.0
  %772 = vmatpush1.msra.mxu0 %v746
  %773 = vmatprep.subr.mxu0 0.0
  %774 = vmatpush1.msra.mxu0 %v747
  %775 = vmatprep.subr.mxu0 0.0
  %776 = vmatpush1.msra.mxu0 %v748
  %777 = vmatprep.subr.mxu0 0.0
  %778 = vmatpush1.msra.mxu0 %v749
  %779 = vmatprep.subr.mxu0 0.0
  %780 = vmatpush1.msra.mxu0 %v750
  %781 = vmatprep.subr.mxu0 0.0
  %782 = vmatpush1.msra.mxu0 %v751
  %783 = vmatprep.subr.mxu0 0.0
  %784 = vmatpush1.msra.mxu0 %v752
  %785 = vmatprep.subr.mxu0 0.0
  %786 = vmatpush1.msra.mxu0 %v753
  %787 = vmatprep.subr.mxu0 0.0
  %788 = vmatpush1.msra.mxu0 %v754
  %789 = vmatprep.subr.mxu0 0.0
  %790 = vmatpush1.msra.mxu0 %v755
  %791 = vmatprep.subr.mxu0 0.0
  %792 = vmatpush1.msra.mxu0 %v756
  %793 = vmatprep.subr.mxu0 0.0
  %794 = vmatpush1.msra.mxu0 %v757
  %795 = vmatprep.subr.mxu0 0.0
  %796 = vmatpush1.msra.mxu0 %v758
  %797 = vmatprep.subr.mxu0 0.0
  %798 = vmatpush1.msra.mxu0 %v759
  %799 = vmatprep.subr.mxu0 0.0
  %800 = vmatpush1.msra.mxu0 0.0
  %801 = vmatprep.subr.mxu0 0.0
  %802 = vmatpush1.msra.mxu0 0.0
  %803 = vmatprep.subr.mxu0 0.0
  %804 = vmatpush1.msra.mxu0 0.0
  %805 = vmatprep.subr.mxu0 0.0
  %806 = vmatpush1.msra.mxu0 0.0
  %807 = vmatprep.subr.mxu0 0.0
  %808 = vmatpush1.msra.mxu0 0.0
  %809 = vmatprep.subr.mxu0 0.0
  %810 = vmatpush1.msra.mxu0 0.0
  %811 = vmatprep.subr.mxu0 0.0
  %812 = vmatpush1.msra.mxu0 0.0
  %813 = vmatprep.subr.mxu0 0.0
  %814 = vmatpush1.msra.mxu0 0.0
  %815 = vmatprep.subr.mxu0 0.0
  %816 = vmatpush1.msra.mxu0 0.0
  %817 = vmatprep.subr.mxu0 0.0
  %818 = vmatpush1.msra.mxu0 0.0
  %819 = vmatprep.subr.mxu0 0.0
  %820 = vmatpush1.msra.mxu0 0.0
  %821 = vmatprep.subr.mxu0 0.0
  %822 = vmatpush1.msra.mxu0 0.0
  %823 = vmatprep.subr.mxu0 0.0
  %824 = vmatpush1.msra.mxu0 0.0
  %825 = vmatprep.subr.mxu0 0.0
  %826 = vmatpush1.msra.mxu0 0.0
  %827 = vmatprep.subr.mxu0 0.0
  %828 = vmatpush1.msra.mxu0 0.0
  %829 = vmatprep.subr.mxu0 0.0
  %830 = vmatpush1.msra.mxu0 0.0
  %831 = vmatprep.mubr.f32.mxu0 0.0
  %832 = vmatmul.mubr.f32.gmra.mrb[0].mxu0 %v728
  %v833 = vpop.f32.mrb[0].mxu0
  %v834 = vadd.f32 %v765, %v833
  %v835 = vpop.f32.mrb[0].mxu0
  %836 = vmatprep.mubr.f32.mxu0 0.0
  %837 = vmatmul.mubr.f32.gmra.mrb[0].mxu0 %v729
  %v838 = vpop.f32.mrb[0].mxu0
  %v839 = vadd.f32 %v765, %v838
  %v840 = vpop.f32.mrb[0].mxu0
  %841 = vmatprep.mubr.f32.mxu0 0.0
  %842 = vmatmul.mubr.f32.gmra.mrb[0].mxu0 %v730
  %v843 = vpop.f32.mrb[0].mxu0
  %v844 = vadd.f32 %v765, %v843
  %v845 = vpop.f32.mrb[0].mxu0
  %846 = vmatprep.mubr.f32.mxu0 0.0
  %847 = vmatmul.mubr.f32.gmra.mrb[0].mxu0 %v731
  %v848 = vpop.f32.mrb[0].mxu0
  %v849 = vadd.f32 %v765, %v848
  %v850 = vpop.f32.mrb[0].mxu0
  %851 = vmatprep.mubr.f32.mxu0 0.0
  %852 = vmatmul.mubr.f32.gmra.mrb[0].mxu0 %v732
  %v853 = vpop.f32.mrb[0].mxu0
  %v854 = vadd.f32 %v765, %v853
  %v855 = vpop.f32.mrb[0].mxu0
  %856 = vmatprep.mubr.f32.mxu0 0.0
  %857 = vmatmul.mubr.f32.gmra.mrb[0].mxu0 %v733
  %v858 = vpop.f32.mrb[0].mxu0
  %v859 = vadd.f32 %v765, %v858
  %v860 = vpop.f32.mrb[0].mxu0
  %861 = vmatprep.mubr.f32.mxu0 0.0
  %862 = vmatmul.mubr.f32.gmra.mrb[0].mxu0 %v734
  %v863 = vpop.f32.mrb[0].mxu0
  %v864 = vadd.f32 %v765, %v863
  %v865 = vpop.f32.mrb[0].mxu0
  %866 = vmatprep.mubr.f32.mxu0 0.0
  %867 = vmatmul.mubr.f32.gmra.mrb[0].mxu0 %v735
  %v868 = vpop.f32.mrb[0].mxu0
  %v869 = vadd.f32 %v765, %v868
  %v870 = vpop.f32.mrb[0].mxu0
  %871 = vmatprep.mubr.f32.mxu0 0.0
  %872 = vmatmul.mubr.f32.gmra.mrb[0].mxu0 %v736
  %v873 = vpop.f32.mrb[0].mxu0
  %v874 = vadd.f32 %v765, %v873
  %v875 = vpop.f32.mrb[0].mxu0
  %876 = vmatprep.mubr.f32.mxu0 0.0
  %877 = vmatmul.mubr.f32.gmra.mrb[0].mxu0 %v737
  %v878 = vpop.f32.mrb[0].mxu0
  %v879 = vadd.f32 %v765, %v878
  %v880 = vpop.f32.mrb[0].mxu0
  %881 = vmatprep.mubr.f32.mxu0 0.0
  %882 = vmatmul.mubr.f32.gmra.mrb[0].mxu0 %v738
  %v883 = vpop.f32.mrb[0].mxu0
  %v884 = vadd.f32 %v765, %v883
  %v885 = vpop.f32.mrb[0].mxu0
  %886 = vmatprep.mubr.f32.mxu0 0.0
  %887 = vmatmul.mubr.f32.gmra.mrb[0].mxu0 %v739
  %v888 = vpop.f32.mrb[0].mxu0
  %v889 = vadd.f32 %v765, %v888
  %v890 = vpop.f32.mrb[0].mxu0
  %891 = vmatprep.mubr.f32.mxu0 0.0
  %892 = vmatmul.mubr.f32.gmra.mrb[0].mxu0 %v740
  %v893 = vpop.f32.mrb[0].mxu0
  %v894 = vadd.f32 %v765, %v893
  %v895 = vpop.f32.mrb[0].mxu0
  %896 = vmatprep.mubr.f32.mxu0 0.0
  %897 = vmatmul.mubr.f32.gmra.mrb[0].mxu0 %v741
  %v898 = vpop.f32.mrb[0].mxu0
  %v899 = vadd.f32 %v765, %v898
  %v900 = vpop.f32.mrb[0].mxu0
  %901 = vmatprep.mubr.f32.mxu0 0.0
  %902 = vmatmul.mubr.f32.gmra.mrb[0].mxu0 %v742
  %v903 = vpop.f32.mrb[0].mxu0
  %v904 = vadd.f32 %v765, %v903
  %v905 = vpop.f32.mrb[0].mxu0
  %906 = vmatprep.mubr.f32.mxu0 0.0
  %907 = vmatmul.mubr.f32.gmra.mrb[0].mxu0 %v743
  %v908 = vpop.f32.mrb[0].mxu0
  %v909 = vadd.f32 %v765, %v908
  %v910 = vpop.f32.mrb[0].mxu0
  %911 = vdwg.mxu0
  %v912 = vld [vmem:[%s7] sm:$0xff]
  %v913 = vld [vmem:[%s7 + $0x8] sm:$0xff]
  %v914 = vld [vmem:[%s7 + $0x10] sm:$0xff]
  %v915 = vld [vmem:[%s7 + $0x18] sm:$0xff]
  %v916 = vld [vmem:[%s7 + $0x20] sm:$0xff]
  %v917 = vld [vmem:[%s7 + $0x28] sm:$0xff]
  %v918 = vld [vmem:[%s7 + $0x30] sm:$0xff]
  %v919 = vld [vmem:[%s7 + $0x38] sm:$0xff]
  %v920 = vld [vmem:[%s7 + $0x40] sm:$0xff]
  %v921 = vld [vmem:[%s7 + $0x48] sm:$0xff]
  %v922 = vld [vmem:[%s7 + $0x50] sm:$0xff]
  %v923 = vld [vmem:[%s7 + $0x58] sm:$0xff]
  %v924 = vld [vmem:[%s7 + $0x60] sm:$0xff]
  %v925 = vld [vmem:[%s7 + $0x68] sm:$0xff]
  %v926 = vld [vmem:[%s7 + $0x70] sm:$0xff]
  %v927 = vld [vmem:[%s7 + $0x78] sm:$0xff]
  %v928 = vld [vmem:[%s8] sm:$0x1]
  %v930 = vlaneseq
  %v931 = vshrl.u32 %v930, 7
  %v932 = vsub.s32 0, %v931
  %v933 = vrot.slane %v928, %v932
  %935 = vmatprep.subr.mxu0 0.0
  %936 = vmatpush1.msra.mxu0 %v912
  %937 = vmatprep.subr.mxu0 0.0
  %938 = vmatpush1.msra.mxu0 %v913
  %939 = vmatprep.subr.mxu0 0.0
  %940 = vmatpush1.msra.mxu0 %v914
  %941 = vmatprep.subr.mxu0 0.0
  %942 = vmatpush1.msra.mxu0 %v915
  %943 = vmatprep.subr.mxu0 0.0
  %944 = vmatpush1.msra.mxu0 %v916
  %945 = vmatprep.subr.mxu0 0.0
  %946 = vmatpush1.msra.mxu0 %v917
  %947 = vmatprep.subr.mxu0 0.0
  %948 = vmatpush1.msra.mxu0 %v918
  %949 = vmatprep.subr.mxu0 0.0
  %950 = vmatpush1.msra.mxu0 %v919
  %951 = vmatprep.subr.mxu0 0.0
  %952 = vmatpush1.msra.mxu0 %v920
  %953 = vmatprep.subr.mxu0 0.0
  %954 = vmatpush1.msra.mxu0 %v921
  %955 = vmatprep.subr.mxu0 0.0
  %956 = vmatpush1.msra.mxu0 %v922
  %957 = vmatprep.subr.mxu0 0.0
  %958 = vmatpush1.msra.mxu0 %v923
  %959 = vmatprep.subr.mxu0 0.0
  %960 = vmatpush1.msra.mxu0 %v924
  %961 = vmatprep.subr.mxu0 0.0
  %962 = vmatpush1.msra.mxu0 %v925
  %963 = vmatprep.subr.mxu0 0.0
  %964 = vmatpush1.msra.mxu0 %v926
  %965 = vmatprep.subr.mxu0 0.0
  %966 = vmatpush1.msra.mxu0 %v927
  %967 = vmatprep.subr.mxu0 0.0
  %968 = vmatpush1.msra.mxu0 0.0
  %969 = vmatprep.subr.mxu0 0.0
  %970 = vmatpush1.msra.mxu0 0.0
  %971 = vmatprep.subr.mxu0 0.0
  %972 = vmatpush1.msra.mxu0 0.0
  %973 = vmatprep.subr.mxu0 0.0
  %974 = vmatpush1.msra.mxu0 0.0
  %975 = vmatprep.subr.mxu0 0.0
  %976 = vmatpush1.msra.mxu0 0.0
  %977 = vmatprep.subr.mxu0 0.0
  %978 = vmatpush1.msra.mxu0 0.0
  %979 = vmatprep.subr.mxu0 0.0
  %980 = vmatpush1.msra.mxu0 0.0
  %981 = vmatprep.subr.mxu0 0.0
  %982 = vmatpush1.msra.mxu0 0.0
  %983 = vmatprep.subr.mxu0 0.0
  %984 = vmatpush1.msra.mxu0 0.0
  %985 = vmatprep.subr.mxu0 0.0
  %986 = vmatpush1.msra.mxu0 0.0
  %987 = vmatprep.subr.mxu0 0.0
  %988 = vmatpush1.msra.mxu0 0.0
  %989 = vmatprep.subr.mxu0 0.0
  %990 = vmatpush1.msra.mxu0 0.0
  %991 = vmatprep.subr.mxu0 0.0
  %992 = vmatpush1.msra.mxu0 0.0
  %993 = vmatprep.subr.mxu0 0.0
  %994 = vmatpush1.msra.mxu0 0.0
  %995 = vmatprep.subr.mxu0 0.0
  %996 = vmatpush1.msra.mxu0 0.0
  %997 = vmatprep.subr.mxu0 0.0
  %998 = vmatpush1.msra.mxu0 0.0
  %999 = vmatprep.mubr.f32.mxu0 0.0
  %1000 = vmatmul.mubr.f32.gmra.mrb[0].mxu0 %v354
  %v1001 = vpop.f32.mrb[0].mxu0
  %v1002 = vadd.f32 %v933, %v1001
  %v1003 = vpop.f32.mrb[0].mxu0
  %1004 = vmatprep.mubr.f32.mxu0 0.0
  %1005 = vmatmul.mubr.f32.gmra.mrb[0].mxu0 %v357
  %v1006 = vpop.f32.mrb[0].mxu0
  %v1007 = vadd.f32 %v933, %v1006
  %v1008 = vpop.f32.mrb[0].mxu0
  %1009 = vmatprep.mubr.f32.mxu0 0.0
  %1010 = vmatmul.mubr.f32.gmra.mrb[0].mxu0 %v362
  %v1011 = vpop.f32.mrb[0].mxu0
  %v1012 = vadd.f32 %v933, %v1011
  %v1013 = vpop.f32.mrb[0].mxu0
  %1014 = vmatprep.mubr.f32.mxu0 0.0
  %1015 = vmatmul.mubr.f32.gmra.mrb[0].mxu0 %v365
  %v1016 = vpop.f32.mrb[0].mxu0
  %v1017 = vadd.f32 %v933, %v1016
  %v1018 = vpop.f32.mrb[0].mxu0
  %1019 = vmatprep.mubr.f32.mxu0 0.0
  %1020 = vmatmul.mubr.f32.gmra.mrb[0].mxu0 %v370
  %v1021 = vpop.f32.mrb[0].mxu0
  %v1022 = vadd.f32 %v933, %v1021
  %v1023 = vpop.f32.mrb[0].mxu0
  %1024 = vmatprep.mubr.f32.mxu0 0.0
  %1025 = vmatmul.mubr.f32.gmra.mrb[0].mxu0 %v373
  %v1026 = vpop.f32.mrb[0].mxu0
  %v1027 = vadd.f32 %v933, %v1026
  %v1028 = vpop.f32.mrb[0].mxu0
  %1029 = vmatprep.mubr.f32.mxu0 0.0
  %1030 = vmatmul.mubr.f32.gmra.mrb[0].mxu0 %v378
  %v1031 = vpop.f32.mrb[0].mxu0
  %v1032 = vadd.f32 %v933, %v1031
  %v1033 = vpop.f32.mrb[0].mxu0
  %1034 = vmatprep.mubr.f32.mxu0 0.0
  %1035 = vmatmul.mubr.f32.gmra.mrb[0].mxu0 %v381
  %v1036 = vpop.f32.mrb[0].mxu0
  %v1037 = vadd.f32 %v933, %v1036
  %v1038 = vpop.f32.mrb[0].mxu0
  %1039 = vmatprep.mubr.f32.mxu0 0.0
  %1040 = vmatmul.mubr.f32.gmra.mrb[0].mxu0 %v386
  %v1041 = vpop.f32.mrb[0].mxu0
  %v1042 = vadd.f32 %v933, %v1041
  %v1043 = vpop.f32.mrb[0].mxu0
  %1044 = vmatprep.mubr.f32.mxu0 0.0
  %1045 = vmatmul.mubr.f32.gmra.mrb[0].mxu0 %v389
  %v1046 = vpop.f32.mrb[0].mxu0
  %v1047 = vadd.f32 %v933, %v1046
  %v1048 = vpop.f32.mrb[0].mxu0
  %1049 = vmatprep.mubr.f32.mxu0 0.0
  %1050 = vmatmul.mubr.f32.gmra.mrb[0].mxu0 %v394
  %v1051 = vpop.f32.mrb[0].mxu0
  %v1052 = vadd.f32 %v933, %v1051
  %v1053 = vpop.f32.mrb[0].mxu0
  %1054 = vmatprep.mubr.f32.mxu0 0.0
  %1055 = vmatmul.mubr.f32.gmra.mrb[0].mxu0 %v397
  %v1056 = vpop.f32.mrb[0].mxu0
  %v1057 = vadd.f32 %v933, %v1056
  %v1058 = vpop.f32.mrb[0].mxu0
  %1059 = vmatprep.mubr.f32.mxu0 0.0
  %1060 = vmatmul.mubr.f32.gmra.mrb[0].mxu0 %v402
  %v1061 = vpop.f32.mrb[0].mxu0
  %v1062 = vadd.f32 %v933, %v1061
  %v1063 = vpop.f32.mrb[0].mxu0
  %1064 = vmatprep.mubr.f32.mxu0 0.0
  %1065 = vmatmul.mubr.f32.gmra.mrb[0].mxu0 %v405
  %v1066 = vpop.f32.mrb[0].mxu0
  %v1067 = vadd.f32 %v933, %v1066
  %v1068 = vpop.f32.mrb[0].mxu0
  %1069 = vmatprep.mubr.f32.mxu0 0.0
  %1070 = vmatmul.mubr.f32.gmra.mrb[0].mxu0 %v410
  %v1071 = vpop.f32.mrb[0].mxu0
  %v1072 = vadd.f32 %v933, %v1071
  %v1073 = vpop.f32.mrb[0].mxu0
  %1074 = vmatprep.mubr.f32.mxu0 0.0
  %1075 = vmatmul.mubr.f32.gmra.mrb[0].mxu0 %v413
  %v1076 = vpop.f32.mrb[0].mxu0
  %v1077 = vadd.f32 %v933, %v1076
  %v1078 = vpop.f32.mrb[0].mxu0
  %1079 = vdwg.mxu0
  %v1080 = vmax.f32 %v1002, 0.0
  %v1081 = vmax.f32 %v1007, 0.0
  %v1082 = vmax.f32 %v1012, 0.0
  %v1083 = vmax.f32 %v1017, 0.0
  %v1084 = vmax.f32 %v1022, 0.0
  %v1085 = vmax.f32 %v1027, 0.0
  %v1086 = vmax.f32 %v1032, 0.0
  %v1087 = vmax.f32 %v1037, 0.0
  %v1088 = vmax.f32 %v1042, 0.0
  %v1089 = vmax.f32 %v1047, 0.0
  %v1090 = vmax.f32 %v1052, 0.0
  %v1091 = vmax.f32 %v1057, 0.0
  %v1092 = vmax.f32 %v1062, 0.0
  %v1093 = vmax.f32 %v1067, 0.0
  %v1094 = vmax.f32 %v1072, 0.0
  %v1095 = vmax.f32 %v1077, 0.0
  %v1096 = vld [vmem:[%s9] sm:$0xff]
  %v1097 = vld [vmem:[%s9 + $0x8] sm:$0xff]
  %v1098 = vld [vmem:[%s9 + $0x10] sm:$0xff]
  %v1099 = vld [vmem:[%s9 + $0x18] sm:$0xff]
  %v1100 = vld [vmem:[%s9 + $0x20] sm:$0xff]
  %v1101 = vld [vmem:[%s9 + $0x28] sm:$0xff]
  %v1102 = vld [vmem:[%s9 + $0x30] sm:$0xff]
  %v1103 = vld [vmem:[%s9 + $0x38] sm:$0xff]
  %v1104 = vld [vmem:[%s9 + $0x40] sm:$0xff]
  %v1105 = vld [vmem:[%s9 + $0x48] sm:$0xff]
  %v1106 = vld [vmem:[%s9 + $0x50] sm:$0xff]
  %v1107 = vld [vmem:[%s9 + $0x58] sm:$0xff]
  %v1108 = vld [vmem:[%s9 + $0x60] sm:$0xff]
  %v1109 = vld [vmem:[%s9 + $0x68] sm:$0xff]
  %v1110 = vld [vmem:[%s9 + $0x70] sm:$0xff]
  %v1111 = vld [vmem:[%s9 + $0x78] sm:$0xff]
  %v1112 = vld [vmem:[%s10] sm:$0x1]
  %v1114 = vlaneseq
  %v1115 = vshrl.u32 %v1114, 7
  %v1116 = vsub.s32 0, %v1115
  %v1117 = vrot.slane %v1112, %v1116
  %1119 = vmatprep.subr.mxu0 0.0
  %1120 = vmatpush1.msra.mxu0 %v1096
  %1121 = vmatprep.subr.mxu0 0.0
  %1122 = vmatpush1.msra.mxu0 %v1097
  %1123 = vmatprep.subr.mxu0 0.0
  %1124 = vmatpush1.msra.mxu0 %v1098
  %1125 = vmatprep.subr.mxu0 0.0
  %1126 = vmatpush1.msra.mxu0 %v1099
  %1127 = vmatprep.subr.mxu0 0.0
  %1128 = vmatpush1.msra.mxu0 %v1100
  %1129 = vmatprep.subr.mxu0 0.0
  %1130 = vmatpush1.msra.mxu0 %v1101
  %1131 = vmatprep.subr.mxu0 0.0
  %1132 = vmatpush1.msra.mxu0 %v1102
  %1133 = vmatprep.subr.mxu0 0.0
  %1134 = vmatpush1.msra.mxu0 %v1103
  %1135 = vmatprep.subr.mxu0 0.0
  %1136 = vmatpush1.msra.mxu0 %v1104
  %1137 = vmatprep.subr.mxu0 0.0
  %1138 = vmatpush1.msra.mxu0 %v1105
  %1139 = vmatprep.subr.mxu0 0.0
  %1140 = vmatpush1.msra.mxu0 %v1106
  %1141 = vmatprep.subr.mxu0 0.0
  %1142 = vmatpush1.msra.mxu0 %v1107
  %1143 = vmatprep.subr.mxu0 0.0
  %1144 = vmatpush1.msra.mxu0 %v1108
  %1145 = vmatprep.subr.mxu0 0.0
  %1146 = vmatpush1.msra.mxu0 %v1109
  %1147 = vmatprep.subr.mxu0 0.0
  %1148 = vmatpush1.msra.mxu0 %v1110
  %1149 = vmatprep.subr.mxu0 0.0
  %1150 = vmatpush1.msra.mxu0 %v1111
  %1151 = vmatprep.subr.mxu0 0.0
  %1152 = vmatpush1.msra.mxu0 0.0
  %1153 = vmatprep.subr.mxu0 0.0
  %1154 = vmatpush1.msra.mxu0 0.0
  %1155 = vmatprep.subr.mxu0 0.0
  %1156 = vmatpush1.msra.mxu0 0.0
  %1157 = vmatprep.subr.mxu0 0.0
  %1158 = vmatpush1.msra.mxu0 0.0
  %1159 = vmatprep.subr.mxu0 0.0
  %1160 = vmatpush1.msra.mxu0 0.0
  %1161 = vmatprep.subr.mxu0 0.0
  %1162 = vmatpush1.msra.mxu0 0.0
  %1163 = vmatprep.subr.mxu0 0.0
  %1164 = vmatpush1.msra.mxu0 0.0
  %1165 = vmatprep.subr.mxu0 0.0
  %1166 = vmatpush1.msra.mxu0 0.0
  %1167 = vmatprep.subr.mxu0 0.0
  %1168 = vmatpush1.msra.mxu0 0.0
  %1169 = vmatprep.subr.mxu0 0.0
  %1170 = vmatpush1.msra.mxu0 0.0
  %1171 = vmatprep.subr.mxu0 0.0
  %1172 = vmatpush1.msra.mxu0 0.0
  %1173 = vmatprep.subr.mxu0 0.0
  %1174 = vmatpush1.msra.mxu0 0.0
  %1175 = vmatprep.subr.mxu0 0.0
  %1176 = vmatpush1.msra.mxu0 0.0
  %1177 = vmatprep.subr.mxu0 0.0
  %1178 = vmatpush1.msra.mxu0 0.0
  %1179 = vmatprep.subr.mxu0 0.0
  %1180 = vmatpush1.msra.mxu0 0.0
  %1181 = vmatprep.subr.mxu0 0.0
  %1182 = vmatpush1.msra.mxu0 0.0
  %1183 = vmatprep.mubr.f32.mxu0 0.0
  %1184 = vmatmul.mubr.f32.gmra.mrb[0].mxu0 %v1080
  %v1185 = vpop.f32.mrb[0].mxu0
  %v1186 = vadd.f32 %v1117, %v1185
  %v1187 = vpop.f32.mrb[0].mxu0
  %1188 = vmatprep.mubr.f32.mxu0 0.0
  %1189 = vmatmul.mubr.f32.gmra.mrb[0].mxu0 %v1081
  %v1190 = vpop.f32.mrb[0].mxu0
  %v1191 = vadd.f32 %v1117, %v1190
  %v1192 = vpop.f32.mrb[0].mxu0
  %1193 = vmatprep.mubr.f32.mxu0 0.0
  %1194 = vmatmul.mubr.f32.gmra.mrb[0].mxu0 %v1082
  %v1195 = vpop.f32.mrb[0].mxu0
  %v1196 = vadd.f32 %v1117, %v1195
  %v1197 = vpop.f32.mrb[0].mxu0
  %1198 = vmatprep.mubr.f32.mxu0 0.0
  %1199 = vmatmul.mubr.f32.gmra.mrb[0].mxu0 %v1083
  %v1200 = vpop.f32.mrb[0].mxu0
  %v1201 = vadd.f32 %v1117, %v1200
  %v1202 = vpop.f32.mrb[0].mxu0
  %1203 = vmatprep.mubr.f32.mxu0 0.0
  %1204 = vmatmul.mubr.f32.gmra.mrb[0].mxu0 %v1084
  %v1205 = vpop.f32.mrb[0].mxu0
  %v1206 = vadd.f32 %v1117, %v1205
  %v1207 = vpop.f32.mrb[0].mxu0
  %1208 = vmatprep.mubr.f32.mxu0 0.0
  %1209 = vmatmul.mubr.f32.gmra.mrb[0].mxu0 %v1085
  %v1210 = vpop.f32.mrb[0].mxu0
  %v1211 = vadd.f32 %v1117, %v1210
  %v1212 = vpop.f32.mrb[0].mxu0
  %1213 = vmatprep.mubr.f32.mxu0 0.0
  %1214 = vmatmul.mubr.f32.gmra.mrb[0].mxu0 %v1086
  %v1215 = vpop.f32.mrb[0].mxu0
  %v1216 = vadd.f32 %v1117, %v1215
  %v1217 = vpop.f32.mrb[0].mxu0
  %1218 = vmatprep.mubr.f32.mxu0 0.0
  %1219 = vmatmul.mubr.f32.gmra.mrb[0].mxu0 %v1087
  %v1220 = vpop.f32.mrb[0].mxu0
  %v1221 = vadd.f32 %v1117, %v1220
  %v1222 = vpop.f32.mrb[0].mxu0
  %1223 = vmatprep.mubr.f32.mxu0 0.0
  %1224 = vmatmul.mubr.f32.gmra.mrb[0].mxu0 %v1088
  %v1225 = vpop.f32.mrb[0].mxu0
  %v1226 = vadd.f32 %v1117, %v1225
  %v1227 = vpop.f32.mrb[0].mxu0
  %1228 = vmatprep.mubr.f32.mxu0 0.0
  %1229 = vmatmul.mubr.f32.gmra.mrb[0].mxu0 %v1089
  %v1230 = vpop.f32.mrb[0].mxu0
  %v1231 = vadd.f32 %v1117, %v1230
  %v1232 = vpop.f32.mrb[0].mxu0
  %1233 = vmatprep.mubr.f32.mxu0 0.0
  %1234 = vmatmul.mubr.f32.gmra.mrb[0].mxu0 %v1090
  %v1235 = vpop.f32.mrb[0].mxu0
  %v1236 = vadd.f32 %v1117, %v1235
  %v1237 = vpop.f32.mrb[0].mxu0
  %1238 = vmatprep.mubr.f32.mxu0 0.0
  %1239 = vmatmul.mubr.f32.gmra.mrb[0].mxu0 %v1091
  %v1240 = vpop.f32.mrb[0].mxu0
  %v1241 = vadd.f32 %v1117, %v1240
  %v1242 = vpop.f32.mrb[0].mxu0
  %1243 = vmatprep.mubr.f32.mxu0 0.0
  %1244 = vmatmul.mubr.f32.gmra.mrb[0].mxu0 %v1092
  %v1245 = vpop.f32.mrb[0].mxu0
  %v1246 = vadd.f32 %v1117, %v1245
  %v1247 = vpop.f32.mrb[0].mxu0
  %1248 = vmatprep.mubr.f32.mxu0 0.0
  %1249 = vmatmul.mubr.f32.gmra.mrb[0].mxu0 %v1093
  %v1250 = vpop.f32.mrb[0].mxu0
  %v1251 = vadd.f32 %v1117, %v1250
  %v1252 = vpop.f32.mrb[0].mxu0
  %1253 = vmatprep.mubr.f32.mxu0 0.0
  %1254 = vmatmul.mubr.f32.gmra.mrb[0].mxu0 %v1094
  %v1255 = vpop.f32.mrb[0].mxu0
  %v1256 = vadd.f32 %v1117, %v1255
  %v1257 = vpop.f32.mrb[0].mxu0
  %1258 = vmatprep.mubr.f32.mxu0 0.0
  %1259 = vmatmul.mubr.f32.gmra.mrb[0].mxu0 %v1095
  %v1260 = vpop.f32.mrb[0].mxu0
  %v1261 = vadd.f32 %v1117, %v1260
  %v1262 = vpop.f32.mrb[0].mxu0
  %1263 = vdwg.mxu0
  %v1264 = vadd.f32 %v834, %v1186
  %v1265 = vadd.f32 %v839, %v1191
  %v1266 = vadd.f32 %v844, %v1196
  %v1267 = vadd.f32 %v849, %v1201
  %v1268 = vadd.f32 %v854, %v1206
  %v1269 = vadd.f32 %v859, %v1211
  %v1270 = vadd.f32 %v864, %v1216
  %v1271 = vadd.f32 %v869, %v1221
  %v1272 = vadd.f32 %v874, %v1226
  %v1273 = vadd.f32 %v879, %v1231
  %v1274 = vadd.f32 %v884, %v1236
  %v1275 = vadd.f32 %v889, %v1241
  %v1276 = vadd.f32 %v894, %v1246
  %v1277 = vadd.f32 %v899, %v1251
  %v1278 = vadd.f32 %v904, %v1256
  %v1279 = vadd.f32 %v909, %v1261
  %v1280 = vld [vmem:[%s11] sm:$0xff]
  %v1281 = vld [vmem:[%s11 + $0x8] sm:$0xff]
  %v1282 = vld [vmem:[%s11 + $0x10] sm:$0xff]
  %v1283 = vld [vmem:[%s11 + $0x18] sm:$0xff]
  %v1284 = vld [vmem:[%s11 + $0x20] sm:$0xff]
  %v1285 = vld [vmem:[%s11 + $0x28] sm:$0xff]
  %v1286 = vld [vmem:[%s11 + $0x30] sm:$0xff]
  %v1287 = vld [vmem:[%s11 + $0x38] sm:$0xff]
  %v1288 = vld [vmem:[%s11 + $0x40] sm:$0xff]
  %v1289 = vld [vmem:[%s11 + $0x48] sm:$0xff]
  %v1290 = vld [vmem:[%s11 + $0x50] sm:$0xff]
  %v1291 = vld [vmem:[%s11 + $0x58] sm:$0xff]
  %v1292 = vld [vmem:[%s11 + $0x60] sm:$0xff]
  %v1293 = vld [vmem:[%s11 + $0x68] sm:$0xff]
  %v1294 = vld [vmem:[%s11 + $0x70] sm:$0xff]
  %v1295 = vld [vmem:[%s11 + $0x78] sm:$0xff]
  %v1296 = vld [vmem:[%s12] sm:$0x1]
  %v1298 = vlaneseq
  %v1299 = vshrl.u32 %v1298, 7
  %v1300 = vsub.s32 0, %v1299
  %v1301 = vrot.slane %v1296, %v1300
  %1303 = vmatprep.subr.mxu0 0.0
  %1304 = vmatpush1.msra.mxu0 %v1280
  %1305 = vmatprep.subr.mxu0 0.0
  %1306 = vmatpush1.msra.mxu0 %v1281
  %1307 = vmatprep.subr.mxu0 0.0
  %1308 = vmatpush1.msra.mxu0 %v1282
  %1309 = vmatprep.subr.mxu0 0.0
  %1310 = vmatpush1.msra.mxu0 %v1283
  %1311 = vmatprep.subr.mxu0 0.0
  %1312 = vmatpush1.msra.mxu0 %v1284
  %1313 = vmatprep.subr.mxu0 0.0
  %1314 = vmatpush1.msra.mxu0 %v1285
  %1315 = vmatprep.subr.mxu0 0.0
  %1316 = vmatpush1.msra.mxu0 %v1286
  %1317 = vmatprep.subr.mxu0 0.0
  %1318 = vmatpush1.msra.mxu0 %v1287
  %1319 = vmatprep.subr.mxu0 0.0
  %1320 = vmatpush1.msra.mxu0 %v1288
  %1321 = vmatprep.subr.mxu0 0.0
  %1322 = vmatpush1.msra.mxu0 %v1289
  %1323 = vmatprep.subr.mxu0 0.0
  %1324 = vmatpush1.msra.mxu0 %v1290
  %1325 = vmatprep.subr.mxu0 0.0
  %1326 = vmatpush1.msra.mxu0 %v1291
  %1327 = vmatprep.subr.mxu0 0.0
  %1328 = vmatpush1.msra.mxu0 %v1292
  %1329 = vmatprep.subr.mxu0 0.0
  %1330 = vmatpush1.msra.mxu0 %v1293
  %1331 = vmatprep.subr.mxu0 0.0
  %1332 = vmatpush1.msra.mxu0 %v1294
  %1333 = vmatprep.subr.mxu0 0.0
  %1334 = vmatpush1.msra.mxu0 %v1295
  %1335 = vmatprep.subr.mxu0 0.0
  %1336 = vmatpush1.msra.mxu0 0.0
  %1337 = vmatprep.subr.mxu0 0.0
  %1338 = vmatpush1.msra.mxu0 0.0
  %1339 = vmatprep.subr.mxu0 0.0
  %1340 = vmatpush1.msra.mxu0 0.0
  %1341 = vmatprep.subr.mxu0 0.0
  %1342 = vmatpush1.msra.mxu0 0.0
  %1343 = vmatprep.subr.mxu0 0.0
  %1344 = vmatpush1.msra.mxu0 0.0
  %1345 = vmatprep.subr.mxu0 0.0
  %1346 = vmatpush1.msra.mxu0 0.0
  %1347 = vmatprep.subr.mxu0 0.0
  %1348 = vmatpush1.msra.mxu0 0.0
  %1349 = vmatprep.subr.mxu0 0.0
  %1350 = vmatpush1.msra.mxu0 0.0
  %1351 = vmatprep.subr.mxu0 0.0
  %1352 = vmatpush1.msra.mxu0 0.0
  %1353 = vmatprep.subr.mxu0 0.0
  %1354 = vmatpush1.msra.mxu0 0.0
  %1355 = vmatprep.subr.mxu0 0.0
  %1356 = vmatpush1.msra.mxu0 0.0
  %1357 = vmatprep.subr.mxu0 0.0
  %1358 = vmatpush1.msra.mxu0 0.0
  %1359 = vmatprep.subr.mxu0 0.0
  %1360 = vmatpush1.msra.mxu0 0.0
  %1361 = vmatprep.subr.mxu0 0.0
  %1362 = vmatpush1.msra.mxu0 0.0
  %1363 = vmatprep.subr.mxu0 0.0
  %1364 = vmatpush1.msra.mxu0 0.0
  %1365 = vmatprep.subr.mxu0 0.0
  %1366 = vmatpush1.msra.mxu0 0.0
  %1367 = vmatprep.mubr.f32.mxu0 0.0
  %1368 = vmatmul.mubr.f32.gmra.mrb[0].mxu0 %v418
  %v1369 = vpop.f32.mrb[0].mxu0
  %v1370 = vadd.f32 %v1301, %v1369
  %v1371 = vpop.f32.mrb[0].mxu0
  %1372 = vmatprep.mubr.f32.mxu0 0.0
  %1373 = vmatmul.mubr.f32.gmra.mrb[0].mxu0 %v421
  %v1374 = vpop.f32.mrb[0].mxu0
  %v1375 = vadd.f32 %v1301, %v1374
  %v1376 = vpop.f32.mrb[0].mxu0
  %1377 = vmatprep.mubr.f32.mxu0 0.0
  %1378 = vmatmul.mubr.f32.gmra.mrb[0].mxu0 %v426
  %v1379 = vpop.f32.mrb[0].mxu0
  %v1380 = vadd.f32 %v1301, %v1379
  %v1381 = vpop.f32.mrb[0].mxu0
  %1382 = vmatprep.mubr.f32.mxu0 0.0
  %1383 = vmatmul.mubr.f32.gmra.mrb[0].mxu0 %v429
  %v1384 = vpop.f32.mrb[0].mxu0
  %v1385 = vadd.f32 %v1301, %v1384
  %v1386 = vpop.f32.mrb[0].mxu0
  %1387 = vmatprep.mubr.f32.mxu0 0.0
  %1388 = vmatmul.mubr.f32.gmra.mrb[0].mxu0 %v434
  %v1389 = vpop.f32.mrb[0].mxu0
  %v1390 = vadd.f32 %v1301, %v1389
  %v1391 = vpop.f32.mrb[0].mxu0
  %1392 = vmatprep.mubr.f32.mxu0 0.0
  %1393 = vmatmul.mubr.f32.gmra.mrb[0].mxu0 %v437
  %v1394 = vpop.f32.mrb[0].mxu0
  %v1395 = vadd.f32 %v1301, %v1394
  %v1396 = vpop.f32.mrb[0].mxu0
  %1397 = vmatprep.mubr.f32.mxu0 0.0
  %1398 = vmatmul.mubr.f32.gmra.mrb[0].mxu0 %v442
  %v1399 = vpop.f32.mrb[0].mxu0
  %v1400 = vadd.f32 %v1301, %v1399
  %v1401 = vpop.f32.mrb[0].mxu0
  %1402 = vmatprep.mubr.f32.mxu0 0.0
  %1403 = vmatmul.mubr.f32.gmra.mrb[0].mxu0 %v445
  %v1404 = vpop.f32.mrb[0].mxu0
  %v1405 = vadd.f32 %v1301, %v1404
  %v1406 = vpop.f32.mrb[0].mxu0
  %1407 = vmatprep.mubr.f32.mxu0 0.0
  %1408 = vmatmul.mubr.f32.gmra.mrb[0].mxu0 %v450
  %v1409 = vpop.f32.mrb[0].mxu0
  %v1410 = vadd.f32 %v1301, %v1409
  %v1411 = vpop.f32.mrb[0].mxu0
  %1412 = vmatprep.mubr.f32.mxu0 0.0
  %1413 = vmatmul.mubr.f32.gmra.mrb[0].mxu0 %v453
  %v1414 = vpop.f32.mrb[0].mxu0
  %v1415 = vadd.f32 %v1301, %v1414
  %v1416 = vpop.f32.mrb[0].mxu0
  %1417 = vmatprep.mubr.f32.mxu0 0.0
  %1418 = vmatmul.mubr.f32.gmra.mrb[0].mxu0 %v458
  %v1419 = vpop.f32.mrb[0].mxu0
  %v1420 = vadd.f32 %v1301, %v1419
  %v1421 = vpop.f32.mrb[0].mxu0
  %1422 = vmatprep.mubr.f32.mxu0 0.0
  %1423 = vmatmul.mubr.f32.gmra.mrb[0].mxu0 %v461
  %v1424 = vpop.f32.mrb[0].mxu0
  %v1425 = vadd.f32 %v1301, %v1424
  %v1426 = vpop.f32.mrb[0].mxu0
  %1427 = vmatprep.mubr.f32.mxu0 0.0
  %1428 = vmatmul.mubr.f32.gmra.mrb[0].mxu0 %v466
  %v1429 = vpop.f32.mrb[0].mxu0
  %v1430 = vadd.f32 %v1301, %v1429
  %v1431 = vpop.f32.mrb[0].mxu0
  %1432 = vmatprep.mubr.f32.mxu0 0.0
  %1433 = vmatmul.mubr.f32.gmra.mrb[0].mxu0 %v469
  %v1434 = vpop.f32.mrb[0].mxu0
  %v1435 = vadd.f32 %v1301, %v1434
  %v1436 = vpop.f32.mrb[0].mxu0
  %1437 = vmatprep.mubr.f32.mxu0 0.0
  %1438 = vmatmul.mubr.f32.gmra.mrb[0].mxu0 %v474
  %v1439 = vpop.f32.mrb[0].mxu0
  %v1440 = vadd.f32 %v1301, %v1439
  %v1441 = vpop.f32.mrb[0].mxu0
  %1442 = vmatprep.mubr.f32.mxu0 0.0
  %1443 = vmatmul.mubr.f32.gmra.mrb[0].mxu0 %v477
  %v1444 = vpop.f32.mrb[0].mxu0
  %v1445 = vadd.f32 %v1301, %v1444
  %v1446 = vpop.f32.mrb[0].mxu0
  %1447 = vdwg.mxu0
  %v1448 = vmax.f32 %v1370, 0.0
  %v1449 = vmax.f32 %v1375, 0.0
  %v1450 = vmax.f32 %v1380, 0.0
  %v1451 = vmax.f32 %v1385, 0.0
  %v1452 = vmax.f32 %v1390, 0.0
  %v1453 = vmax.f32 %v1395, 0.0
  %v1454 = vmax.f32 %v1400, 0.0
  %v1455 = vmax.f32 %v1405, 0.0
  %v1456 = vmax.f32 %v1410, 0.0
  %v1457 = vmax.f32 %v1415, 0.0
  %v1458 = vmax.f32 %v1420, 0.0
  %v1459 = vmax.f32 %v1425, 0.0
  %v1460 = vmax.f32 %v1430, 0.0
  %v1461 = vmax.f32 %v1435, 0.0
  %v1462 = vmax.f32 %v1440, 0.0
  %v1463 = vmax.f32 %v1445, 0.0
  %v1464 = vld [vmem:[%s13] sm:$0xff]
  %v1465 = vld [vmem:[%s13 + $0x8] sm:$0xff]
  %v1466 = vld [vmem:[%s13 + $0x10] sm:$0xff]
  %v1467 = vld [vmem:[%s13 + $0x18] sm:$0xff]
  %v1468 = vld [vmem:[%s13 + $0x20] sm:$0xff]
  %v1469 = vld [vmem:[%s13 + $0x28] sm:$0xff]
  %v1470 = vld [vmem:[%s13 + $0x30] sm:$0xff]
  %v1471 = vld [vmem:[%s13 + $0x38] sm:$0xff]
  %v1472 = vld [vmem:[%s13 + $0x40] sm:$0xff]
  %v1473 = vld [vmem:[%s13 + $0x48] sm:$0xff]
  %v1474 = vld [vmem:[%s13 + $0x50] sm:$0xff]
  %v1475 = vld [vmem:[%s13 + $0x58] sm:$0xff]
  %v1476 = vld [vmem:[%s13 + $0x60] sm:$0xff]
  %v1477 = vld [vmem:[%s13 + $0x68] sm:$0xff]
  %v1478 = vld [vmem:[%s13 + $0x70] sm:$0xff]
  %v1479 = vld [vmem:[%s13 + $0x78] sm:$0xff]
  %v1480 = vld [vmem:[%s14] sm:$0x1]
  %v1482 = vlaneseq
  %v1483 = vshrl.u32 %v1482, 7
  %v1484 = vsub.s32 0, %v1483
  %v1485 = vrot.slane %v1480, %v1484
  %1487 = vmatprep.subr.mxu0 0.0
  %1488 = vmatpush1.msra.mxu0 %v1464
  %1489 = vmatprep.subr.mxu0 0.0
  %1490 = vmatpush1.msra.mxu0 %v1465
  %1491 = vmatprep.subr.mxu0 0.0
  %1492 = vmatpush1.msra.mxu0 %v1466
  %1493 = vmatprep.subr.mxu0 0.0
  %1494 = vmatpush1.msra.mxu0 %v1467
  %1495 = vmatprep.subr.mxu0 0.0
  %1496 = vmatpush1.msra.mxu0 %v1468
  %1497 = vmatprep.subr.mxu0 0.0
  %1498 = vmatpush1.msra.mxu0 %v1469
  %1499 = vmatprep.subr.mxu0 0.0
  %1500 = vmatpush1.msra.mxu0 %v1470
  %1501 = vmatprep.subr.mxu0 0.0
  %1502 = vmatpush1.msra.mxu0 %v1471
  %1503 = vmatprep.subr.mxu0 0.0
  %1504 = vmatpush1.msra.mxu0 %v1472
  %1505 = vmatprep.subr.mxu0 0.0
  %1506 = vmatpush1.msra.mxu0 %v1473
  %1507 = vmatprep.subr.mxu0 0.0
  %1508 = vmatpush1.msra.mxu0 %v1474
  %1509 = vmatprep.subr.mxu0 0.0
  %1510 = vmatpush1.msra.mxu0 %v1475
  %1511 = vmatprep.subr.mxu0 0.0
  %1512 = vmatpush1.msra.mxu0 %v1476
  %1513 = vmatprep.subr.mxu0 0.0
  %1514 = vmatpush1.msra.mxu0 %v1477
  %1515 = vmatprep.subr.mxu0 0.0
  %1516 = vmatpush1.msra.mxu0 %v1478
  %1517 = vmatprep.subr.mxu0 0.0
  %1518 = vmatpush1.msra.mxu0 %v1479
  %1519 = vmatprep.subr.mxu0 0.0
  %1520 = vmatpush1.msra.mxu0 0.0
  %1521 = vmatprep.subr.mxu0 0.0
  %1522 = vmatpush1.msra.mxu0 0.0
  %1523 = vmatprep.subr.mxu0 0.0
  %1524 = vmatpush1.msra.mxu0 0.0
  %1525 = vmatprep.subr.mxu0 0.0
  %1526 = vmatpush1.msra.mxu0 0.0
  %1527 = vmatprep.subr.mxu0 0.0
  %1528 = vmatpush1.msra.mxu0 0.0
  %1529 = vmatprep.subr.mxu0 0.0
  %1530 = vmatpush1.msra.mxu0 0.0
  %1531 = vmatprep.subr.mxu0 0.0
  %1532 = vmatpush1.msra.mxu0 0.0
  %1533 = vmatprep.subr.mxu0 0.0
  %1534 = vmatpush1.msra.mxu0 0.0
  %1535 = vmatprep.subr.mxu0 0.0
  %1536 = vmatpush1.msra.mxu0 0.0
  %1537 = vmatprep.subr.mxu0 0.0
  %1538 = vmatpush1.msra.mxu0 0.0
  %1539 = vmatprep.subr.mxu0 0.0
  %1540 = vmatpush1.msra.mxu0 0.0
  %1541 = vmatprep.subr.mxu0 0.0
  %1542 = vmatpush1.msra.mxu0 0.0
  %1543 = vmatprep.subr.mxu0 0.0
  %1544 = vmatpush1.msra.mxu0 0.0
  %1545 = vmatprep.subr.mxu0 0.0
  %1546 = vmatpush1.msra.mxu0 0.0
  %1547 = vmatprep.subr.mxu0 0.0
  %1548 = vmatpush1.msra.mxu0 0.0
  %1549 = vmatprep.subr.mxu0 0.0
  %1550 = vmatpush1.msra.mxu0 0.0
  %1551 = vmatprep.mubr.f32.mxu0 0.0
  %1552 = vmatmul.mubr.f32.gmra.mrb[0].mxu0 %v1448
  %v1553 = vpop.f32.mrb[0].mxu0
  %v1554 = vadd.f32 %v1485, %v1553
  %v1555 = vpop.f32.mrb[0].mxu0
  %1556 = vmatprep.mubr.f32.mxu0 0.0
  %1557 = vmatmul.mubr.f32.gmra.mrb[0].mxu0 %v1449
  %v1558 = vpop.f32.mrb[0].mxu0
  %v1559 = vadd.f32 %v1485, %v1558
  %v1560 = vpop.f32.mrb[0].mxu0
  %1561 = vmatprep.mubr.f32.mxu0 0.0
  %1562 = vmatmul.mubr.f32.gmra.mrb[0].mxu0 %v1450
  %v1563 = vpop.f32.mrb[0].mxu0
  %v1564 = vadd.f32 %v1485, %v1563
  %v1565 = vpop.f32.mrb[0].mxu0
  %1566 = vmatprep.mubr.f32.mxu0 0.0
  %1567 = vmatmul.mubr.f32.gmra.mrb[0].mxu0 %v1451
  %v1568 = vpop.f32.mrb[0].mxu0
  %v1569 = vadd.f32 %v1485, %v1568
  %v1570 = vpop.f32.mrb[0].mxu0
  %1571 = vmatprep.mubr.f32.mxu0 0.0
  %1572 = vmatmul.mubr.f32.gmra.mrb[0].mxu0 %v1452
  %v1573 = vpop.f32.mrb[0].mxu0
  %v1574 = vadd.f32 %v1485, %v1573
  %v1575 = vpop.f32.mrb[0].mxu0
  %1576 = vmatprep.mubr.f32.mxu0 0.0
  %1577 = vmatmul.mubr.f32.gmra.mrb[0].mxu0 %v1453
  %v1578 = vpop.f32.mrb[0].mxu0
  %v1579 = vadd.f32 %v1485, %v1578
  %v1580 = vpop.f32.mrb[0].mxu0
  %1581 = vmatprep.mubr.f32.mxu0 0.0
  %1582 = vmatmul.mubr.f32.gmra.mrb[0].mxu0 %v1454
  %v1583 = vpop.f32.mrb[0].mxu0
  %v1584 = vadd.f32 %v1485, %v1583
  %v1585 = vpop.f32.mrb[0].mxu0
  %1586 = vmatprep.mubr.f32.mxu0 0.0
  %1587 = vmatmul.mubr.f32.gmra.mrb[0].mxu0 %v1455
  %v1588 = vpop.f32.mrb[0].mxu0
  %v1589 = vadd.f32 %v1485, %v1588
  %v1590 = vpop.f32.mrb[0].mxu0
  %1591 = vmatprep.mubr.f32.mxu0 0.0
  %1592 = vmatmul.mubr.f32.gmra.mrb[0].mxu0 %v1456
  %v1593 = vpop.f32.mrb[0].mxu0
  %v1594 = vadd.f32 %v1485, %v1593
  %v1595 = vpop.f32.mrb[0].mxu0
  %1596 = vmatprep.mubr.f32.mxu0 0.0
  %1597 = vmatmul.mubr.f32.gmra.mrb[0].mxu0 %v1457
  %v1598 = vpop.f32.mrb[0].mxu0
  %v1599 = vadd.f32 %v1485, %v1598
  %v1600 = vpop.f32.mrb[0].mxu0
  %1601 = vmatprep.mubr.f32.mxu0 0.0
  %1602 = vmatmul.mubr.f32.gmra.mrb[0].mxu0 %v1458
  %v1603 = vpop.f32.mrb[0].mxu0
  %v1604 = vadd.f32 %v1485, %v1603
  %v1605 = vpop.f32.mrb[0].mxu0
  %1606 = vmatprep.mubr.f32.mxu0 0.0
  %1607 = vmatmul.mubr.f32.gmra.mrb[0].mxu0 %v1459
  %v1608 = vpop.f32.mrb[0].mxu0
  %v1609 = vadd.f32 %v1485, %v1608
  %v1610 = vpop.f32.mrb[0].mxu0
  %1611 = vmatprep.mubr.f32.mxu0 0.0
  %1612 = vmatmul.mubr.f32.gmra.mrb[0].mxu0 %v1460
  %v1613 = vpop.f32.mrb[0].mxu0
  %v1614 = vadd.f32 %v1485, %v1613
  %v1615 = vpop.f32.mrb[0].mxu0
  %1616 = vmatprep.mubr.f32.mxu0 0.0
  %1617 = vmatmul.mubr.f32.gmra.mrb[0].mxu0 %v1461
  %v1618 = vpop.f32.mrb[0].mxu0
  %v1619 = vadd.f32 %v1485, %v1618
  %v1620 = vpop.f32.mrb[0].mxu0
  %1621 = vmatprep.mubr.f32.mxu0 0.0
  %1622 = vmatmul.mubr.f32.gmra.mrb[0].mxu0 %v1462
  %v1623 = vpop.f32.mrb[0].mxu0
  %v1624 = vadd.f32 %v1485, %v1623
  %v1625 = vpop.f32.mrb[0].mxu0
  %1626 = vmatprep.mubr.f32.mxu0 0.0
  %1627 = vmatmul.mubr.f32.gmra.mrb[0].mxu0 %v1463
  %v1628 = vpop.f32.mrb[0].mxu0
  %v1629 = vadd.f32 %v1485, %v1628
  %v1630 = vpop.f32.mrb[0].mxu0
  %1631 = vdwg.mxu0
  %v1632 = vadd.f32 %v1264, %v1554
  %v1633 = vadd.f32 %v1265, %v1559
  %v1634 = vadd.f32 %v1266, %v1564
  %v1635 = vadd.f32 %v1267, %v1569
  %v1636 = vadd.f32 %v1268, %v1574
  %v1637 = vadd.f32 %v1269, %v1579
  %v1638 = vadd.f32 %v1270, %v1584
  %v1639 = vadd.f32 %v1271, %v1589
  %v1640 = vadd.f32 %v1272, %v1594
  %v1641 = vadd.f32 %v1273, %v1599
  %v1642 = vadd.f32 %v1274, %v1604
  %v1643 = vadd.f32 %v1275, %v1609
  %v1644 = vadd.f32 %v1276, %v1614
  %v1645 = vadd.f32 %v1277, %v1619
  %v1646 = vadd.f32 %v1278, %v1624
  %v1647 = vadd.f32 %v1279, %v1629
  %v1648 = vld [vmem:[%s15] sm:$0xff]
  %v1649 = vld [vmem:[%s15 + $0x8] sm:$0xff]
  %v1650 = vld [vmem:[%s15 + $0x10] sm:$0xff]
  %v1651 = vld [vmem:[%s15 + $0x18] sm:$0xff]
  %v1652 = vld [vmem:[%s15 + $0x20] sm:$0xff]
  %v1653 = vld [vmem:[%s15 + $0x28] sm:$0xff]
  %v1654 = vld [vmem:[%s15 + $0x30] sm:$0xff]
  %v1655 = vld [vmem:[%s15 + $0x38] sm:$0xff]
  %v1656 = vld [vmem:[%s15 + $0x40] sm:$0xff]
  %v1657 = vld [vmem:[%s15 + $0x48] sm:$0xff]
  %v1658 = vld [vmem:[%s15 + $0x50] sm:$0xff]
  %v1659 = vld [vmem:[%s15 + $0x58] sm:$0xff]
  %v1660 = vld [vmem:[%s15 + $0x60] sm:$0xff]
  %v1661 = vld [vmem:[%s15 + $0x68] sm:$0xff]
  %v1662 = vld [vmem:[%s15 + $0x70] sm:$0xff]
  %v1663 = vld [vmem:[%s15 + $0x78] sm:$0xff]
  %v1664 = vld [vmem:[%s16] sm:$0x1]
  %v1666 = vlaneseq
  %v1667 = vshrl.u32 %v1666, 7
  %v1668 = vsub.s32 0, %v1667
  %v1669 = vrot.slane %v1664, %v1668
  %1671 = vmatprep.subr.mxu0 0.0
  %1672 = vmatpush1.msra.mxu0 %v1648
  %1673 = vmatprep.subr.mxu0 0.0
  %1674 = vmatpush1.msra.mxu0 %v1649
  %1675 = vmatprep.subr.mxu0 0.0
  %1676 = vmatpush1.msra.mxu0 %v1650
  %1677 = vmatprep.subr.mxu0 0.0
  %1678 = vmatpush1.msra.mxu0 %v1651
  %1679 = vmatprep.subr.mxu0 0.0
  %1680 = vmatpush1.msra.mxu0 %v1652
  %1681 = vmatprep.subr.mxu0 0.0
  %1682 = vmatpush1.msra.mxu0 %v1653
  %1683 = vmatprep.subr.mxu0 0.0
  %1684 = vmatpush1.msra.mxu0 %v1654
  %1685 = vmatprep.subr.mxu0 0.0
  %1686 = vmatpush1.msra.mxu0 %v1655
  %1687 = vmatprep.subr.mxu0 0.0
  %1688 = vmatpush1.msra.mxu0 %v1656
  %1689 = vmatprep.subr.mxu0 0.0
  %1690 = vmatpush1.msra.mxu0 %v1657
  %1691 = vmatprep.subr.mxu0 0.0
  %1692 = vmatpush1.msra.mxu0 %v1658
  %1693 = vmatprep.subr.mxu0 0.0
  %1694 = vmatpush1.msra.mxu0 %v1659
  %1695 = vmatprep.subr.mxu0 0.0
  %1696 = vmatpush1.msra.mxu0 %v1660
  %1697 = vmatprep.subr.mxu0 0.0
  %1698 = vmatpush1.msra.mxu0 %v1661
  %1699 = vmatprep.subr.mxu0 0.0
  %1700 = vmatpush1.msra.mxu0 %v1662
  %1701 = vmatprep.subr.mxu0 0.0
  %1702 = vmatpush1.msra.mxu0 %v1663
  %1703 = vmatprep.subr.mxu0 0.0
  %1704 = vmatpush1.msra.mxu0 0.0
  %1705 = vmatprep.subr.mxu0 0.0
  %1706 = vmatpush1.msra.mxu0 0.0
  %1707 = vmatprep.subr.mxu0 0.0
  %1708 = vmatpush1.msra.mxu0 0.0
  %1709 = vmatprep.subr.mxu0 0.0
  %1710 = vmatpush1.msra.mxu0 0.0
  %1711 = vmatprep.subr.mxu0 0.0
  %1712 = vmatpush1.msra.mxu0 0.0
  %1713 = vmatprep.subr.mxu0 0.0
  %1714 = vmatpush1.msra.mxu0 0.0
  %1715 = vmatprep.subr.mxu0 0.0
  %1716 = vmatpush1.msra.mxu0 0.0
  %1717 = vmatprep.subr.mxu0 0.0
  %1718 = vmatpush1.msra.mxu0 0.0
  %1719 = vmatprep.subr.mxu0 0.0
  %1720 = vmatpush1.msra.mxu0 0.0
  %1721 = vmatprep.subr.mxu0 0.0
  %1722 = vmatpush1.msra.mxu0 0.0
  %1723 = vmatprep.subr.mxu0 0.0
  %1724 = vmatpush1.msra.mxu0 0.0
  %1725 = vmatprep.subr.mxu0 0.0
  %1726 = vmatpush1.msra.mxu0 0.0
  %1727 = vmatprep.subr.mxu0 0.0
  %1728 = vmatpush1.msra.mxu0 0.0
  %1729 = vmatprep.subr.mxu0 0.0
  %1730 = vmatpush1.msra.mxu0 0.0
  %1731 = vmatprep.subr.mxu0 0.0
  %1732 = vmatpush1.msra.mxu0 0.0
  %1733 = vmatprep.subr.mxu0 0.0
  %1734 = vmatpush1.msra.mxu0 0.0
  %1735 = vmatprep.mubr.f32.mxu0 0.0
  %1736 = vmatmul.mubr.f32.gmra.mrb[0].mxu0 %v482
  %v1737 = vpop.f32.mrb[0].mxu0
  %v1738 = vadd.f32 %v1669, %v1737
  %v1739 = vpop.f32.mrb[0].mxu0
  %1740 = vmatprep.mubr.f32.mxu0 0.0
  %1741 = vmatmul.mubr.f32.gmra.mrb[0].mxu0 %v485
  %v1742 = vpop.f32.mrb[0].mxu0
  %v1743 = vadd.f32 %v1669, %v1742
  %v1744 = vpop.f32.mrb[0].mxu0
  %1745 = vmatprep.mubr.f32.mxu0 0.0
  %1746 = vmatmul.mubr.f32.gmra.mrb[0].mxu0 %v490
  %v1747 = vpop.f32.mrb[0].mxu0
  %v1748 = vadd.f32 %v1669, %v1747
  %v1749 = vpop.f32.mrb[0].mxu0
  %1750 = vmatprep.mubr.f32.mxu0 0.0
  %1751 = vmatmul.mubr.f32.gmra.mrb[0].mxu0 %v493
  %v1752 = vpop.f32.mrb[0].mxu0
  %v1753 = vadd.f32 %v1669, %v1752
  %v1754 = vpop.f32.mrb[0].mxu0
  %1755 = vmatprep.mubr.f32.mxu0 0.0
  %1756 = vmatmul.mubr.f32.gmra.mrb[0].mxu0 %v498
  %v1757 = vpop.f32.mrb[0].mxu0
  %v1758 = vadd.f32 %v1669, %v1757
  %v1759 = vpop.f32.mrb[0].mxu0
  %1760 = vmatprep.mubr.f32.mxu0 0.0
  %1761 = vmatmul.mubr.f32.gmra.mrb[0].mxu0 %v501
  %v1762 = vpop.f32.mrb[0].mxu0
  %v1763 = vadd.f32 %v1669, %v1762
  %v1764 = vpop.f32.mrb[0].mxu0
  %1765 = vmatprep.mubr.f32.mxu0 0.0
  %1766 = vmatmul.mubr.f32.gmra.mrb[0].mxu0 %v506
  %v1767 = vpop.f32.mrb[0].mxu0
  %v1768 = vadd.f32 %v1669, %v1767
  %v1769 = vpop.f32.mrb[0].mxu0
  %1770 = vmatprep.mubr.f32.mxu0 0.0
  %1771 = vmatmul.mubr.f32.gmra.mrb[0].mxu0 %v509
  %v1772 = vpop.f32.mrb[0].mxu0
  %v1773 = vadd.f32 %v1669, %v1772
  %v1774 = vpop.f32.mrb[0].mxu0
  %1775 = vmatprep.mubr.f32.mxu0 0.0
  %1776 = vmatmul.mubr.f32.gmra.mrb[0].mxu0 %v514
  %v1777 = vpop.f32.mrb[0].mxu0
  %v1778 = vadd.f32 %v1669, %v1777
  %v1779 = vpop.f32.mrb[0].mxu0
  %1780 = vmatprep.mubr.f32.mxu0 0.0
  %1781 = vmatmul.mubr.f32.gmra.mrb[0].mxu0 %v517
  %v1782 = vpop.f32.mrb[0].mxu0
  %v1783 = vadd.f32 %v1669, %v1782
  %v1784 = vpop.f32.mrb[0].mxu0
  %1785 = vmatprep.mubr.f32.mxu0 0.0
  %1786 = vmatmul.mubr.f32.gmra.mrb[0].mxu0 %v522
  %v1787 = vpop.f32.mrb[0].mxu0
  %v1788 = vadd.f32 %v1669, %v1787
  %v1789 = vpop.f32.mrb[0].mxu0
  %1790 = vmatprep.mubr.f32.mxu0 0.0
  %1791 = vmatmul.mubr.f32.gmra.mrb[0].mxu0 %v525
  %v1792 = vpop.f32.mrb[0].mxu0
  %v1793 = vadd.f32 %v1669, %v1792
  %v1794 = vpop.f32.mrb[0].mxu0
  %1795 = vmatprep.mubr.f32.mxu0 0.0
  %1796 = vmatmul.mubr.f32.gmra.mrb[0].mxu0 %v530
  %v1797 = vpop.f32.mrb[0].mxu0
  %v1798 = vadd.f32 %v1669, %v1797
  %v1799 = vpop.f32.mrb[0].mxu0
  %1800 = vmatprep.mubr.f32.mxu0 0.0
  %1801 = vmatmul.mubr.f32.gmra.mrb[0].mxu0 %v533
  %v1802 = vpop.f32.mrb[0].mxu0
  %v1803 = vadd.f32 %v1669, %v1802
  %v1804 = vpop.f32.mrb[0].mxu0
  %1805 = vmatprep.mubr.f32.mxu0 0.0
  %1806 = vmatmul.mubr.f32.gmra.mrb[0].mxu0 %v538
  %v1807 = vpop.f32.mrb[0].mxu0
  %v1808 = vadd.f32 %v1669, %v1807
  %v1809 = vpop.f32.mrb[0].mxu0
  %1810 = vmatprep.mubr.f32.mxu0 0.0
  %1811 = vmatmul.mubr.f32.gmra.mrb[0].mxu0 %v541
  %v1812 = vpop.f32.mrb[0].mxu0
  %v1813 = vadd.f32 %v1669, %v1812
  %v1814 = vpop.f32.mrb[0].mxu0
  %1815 = vdwg.mxu0
  %v1816 = vmax.f32 %v1738, 0.0
  %v1817 = vmax.f32 %v1743, 0.0
  %v1818 = vmax.f32 %v1748, 0.0
  %v1819 = vmax.f32 %v1753, 0.0
  %v1820 = vmax.f32 %v1758, 0.0
  %v1821 = vmax.f32 %v1763, 0.0
  %v1822 = vmax.f32 %v1768, 0.0
  %v1823 = vmax.f32 %v1773, 0.0
  %v1824 = vmax.f32 %v1778, 0.0
  %v1825 = vmax.f32 %v1783, 0.0
  %v1826 = vmax.f32 %v1788, 0.0
  %v1827 = vmax.f32 %v1793, 0.0
  %v1828 = vmax.f32 %v1798, 0.0
  %v1829 = vmax.f32 %v1803, 0.0
  %v1830 = vmax.f32 %v1808, 0.0
  %v1831 = vmax.f32 %v1813, 0.0
  %v1832 = vld [vmem:[%s17] sm:$0xff]
  %v1833 = vld [vmem:[%s17 + $0x8] sm:$0xff]
  %v1834 = vld [vmem:[%s17 + $0x10] sm:$0xff]
  %v1835 = vld [vmem:[%s17 + $0x18] sm:$0xff]
  %v1836 = vld [vmem:[%s17 + $0x20] sm:$0xff]
  %v1837 = vld [vmem:[%s17 + $0x28] sm:$0xff]
  %v1838 = vld [vmem:[%s17 + $0x30] sm:$0xff]
  %v1839 = vld [vmem:[%s17 + $0x38] sm:$0xff]
  %v1840 = vld [vmem:[%s17 + $0x40] sm:$0xff]
  %v1841 = vld [vmem:[%s17 + $0x48] sm:$0xff]
  %v1842 = vld [vmem:[%s17 + $0x50] sm:$0xff]
  %v1843 = vld [vmem:[%s17 + $0x58] sm:$0xff]
  %v1844 = vld [vmem:[%s17 + $0x60] sm:$0xff]
  %v1845 = vld [vmem:[%s17 + $0x68] sm:$0xff]
  %v1846 = vld [vmem:[%s17 + $0x70] sm:$0xff]
  %v1847 = vld [vmem:[%s17 + $0x78] sm:$0xff]
  %v1848 = vld [vmem:[%s18] sm:$0x1]
  %v1850 = vlaneseq
  %v1851 = vshrl.u32 %v1850, 7
  %v1852 = vsub.s32 0, %v1851
  %v1853 = vrot.slane %v1848, %v1852
  %1855 = vmatprep.subr.mxu0 0.0
  %1856 = vmatpush1.msra.mxu0 %v1832
  %1857 = vmatprep.subr.mxu0 0.0
  %1858 = vmatpush1.msra.mxu0 %v1833
  %1859 = vmatprep.subr.mxu0 0.0
  %1860 = vmatpush1.msra.mxu0 %v1834
  %1861 = vmatprep.subr.mxu0 0.0
  %1862 = vmatpush1.msra.mxu0 %v1835
  %1863 = vmatprep.subr.mxu0 0.0
  %1864 = vmatpush1.msra.mxu0 %v1836
  %1865 = vmatprep.subr.mxu0 0.0
  %1866 = vmatpush1.msra.mxu0 %v1837
  %1867 = vmatprep.subr.mxu0 0.0
  %1868 = vmatpush1.msra.mxu0 %v1838
  %1869 = vmatprep.subr.mxu0 0.0
  %1870 = vmatpush1.msra.mxu0 %v1839
  %1871 = vmatprep.subr.mxu0 0.0
  %1872 = vmatpush1.msra.mxu0 %v1840
  %1873 = vmatprep.subr.mxu0 0.0
  %1874 = vmatpush1.msra.mxu0 %v1841
  %1875 = vmatprep.subr.mxu0 0.0
  %1876 = vmatpush1.msra.mxu0 %v1842
  %1877 = vmatprep.subr.mxu0 0.0
  %1878 = vmatpush1.msra.mxu0 %v1843
  %1879 = vmatprep.subr.mxu0 0.0
  %1880 = vmatpush1.msra.mxu0 %v1844
  %1881 = vmatprep.subr.mxu0 0.0
  %1882 = vmatpush1.msra.mxu0 %v1845
  %1883 = vmatprep.subr.mxu0 0.0
  %1884 = vmatpush1.msra.mxu0 %v1846
  %1885 = vmatprep.subr.mxu0 0.0
  %1886 = vmatpush1.msra.mxu0 %v1847
  %1887 = vmatprep.subr.mxu0 0.0
  %1888 = vmatpush1.msra.mxu0 0.0
  %1889 = vmatprep.subr.mxu0 0.0
  %1890 = vmatpush1.msra.mxu0 0.0
  %1891 = vmatprep.subr.mxu0 0.0
  %1892 = vmatpush1.msra.mxu0 0.0
  %1893 = vmatprep.subr.mxu0 0.0
  %1894 = vmatpush1.msra.mxu0 0.0
  %1895 = vmatprep.subr.mxu0 0.0
  %1896 = vmatpush1.msra.mxu0 0.0
  %1897 = vmatprep.subr.mxu0 0.0
  %1898 = vmatpush1.msra.mxu0 0.0
  %1899 = vmatprep.subr.mxu0 0.0
  %1900 = vmatpush1.msra.mxu0 0.0
  %1901 = vmatprep.subr.mxu0 0.0
  %1902 = vmatpush1.msra.mxu0 0.0
  %1903 = vmatprep.subr.mxu0 0.0
  %1904 = vmatpush1.msra.mxu0 0.0
  %1905 = vmatprep.subr.mxu0 0.0
  %1906 = vmatpush1.msra.mxu0 0.0
  %1907 = vmatprep.subr.mxu0 0.0
  %1908 = vmatpush1.msra.mxu0 0.0
  %1909 = vmatprep.subr.mxu0 0.0
  %1910 = vmatpush1.msra.mxu0 0.0
  %1911 = vmatprep.subr.mxu0 0.0
  %1912 = vmatpush1.msra.mxu0 0.0
  %1913 = vmatprep.subr.mxu0 0.0
  %1914 = vmatpush1.msra.mxu0 0.0
  %1915 = vmatprep.subr.mxu0 0.0
  %1916 = vmatpush1.msra.mxu0 0.0
  %1917 = vmatprep.subr.mxu0 0.0
  %1918 = vmatpush1.msra.mxu0 0.0
  %1919 = vmatprep.mubr.f32.mxu0 0.0
  %1920 = vmatmul.mubr.f32.gmra.mrb[0].mxu0 %v1816
  %v1921 = vpop.f32.mrb[0].mxu0
  %v1922 = vadd.f32 %v1853, %v1921
  %v1923 = vpop.f32.mrb[0].mxu0
  %1924 = vmatprep.mubr.f32.mxu0 0.0
  %1925 = vmatmul.mubr.f32.gmra.mrb[0].mxu0 %v1817
  %v1926 = vpop.f32.mrb[0].mxu0
  %v1927 = vadd.f32 %v1853, %v1926
  %v1928 = vpop.f32.mrb[0].mxu0
  %1929 = vmatprep.mubr.f32.mxu0 0.0
  %1930 = vmatmul.mubr.f32.gmra.mrb[0].mxu0 %v1818
  %v1931 = vpop.f32.mrb[0].mxu0
  %v1932 = vadd.f32 %v1853, %v1931
  %v1933 = vpop.f32.mrb[0].mxu0
  %1934 = vmatprep.mubr.f32.mxu0 0.0
  %1935 = vmatmul.mubr.f32.gmra.mrb[0].mxu0 %v1819
  %v1936 = vpop.f32.mrb[0].mxu0
  %v1937 = vadd.f32 %v1853, %v1936
  %v1938 = vpop.f32.mrb[0].mxu0
  %1939 = vmatprep.mubr.f32.mxu0 0.0
  %1940 = vmatmul.mubr.f32.gmra.mrb[0].mxu0 %v1820
  %v1941 = vpop.f32.mrb[0].mxu0
  %v1942 = vadd.f32 %v1853, %v1941
  %v1943 = vpop.f32.mrb[0].mxu0
  %1944 = vmatprep.mubr.f32.mxu0 0.0
  %1945 = vmatmul.mubr.f32.gmra.mrb[0].mxu0 %v1821
  %v1946 = vpop.f32.mrb[0].mxu0
  %v1947 = vadd.f32 %v1853, %v1946
  %v1948 = vpop.f32.mrb[0].mxu0
  %1949 = vmatprep.mubr.f32.mxu0 0.0
  %1950 = vmatmul.mubr.f32.gmra.mrb[0].mxu0 %v1822
  %v1951 = vpop.f32.mrb[0].mxu0
  %v1952 = vadd.f32 %v1853, %v1951
  %v1953 = vpop.f32.mrb[0].mxu0
  %1954 = vmatprep.mubr.f32.mxu0 0.0
  %1955 = vmatmul.mubr.f32.gmra.mrb[0].mxu0 %v1823
  %v1956 = vpop.f32.mrb[0].mxu0
  %v1957 = vadd.f32 %v1853, %v1956
  %v1958 = vpop.f32.mrb[0].mxu0
  %1959 = vmatprep.mubr.f32.mxu0 0.0
  %1960 = vmatmul.mubr.f32.gmra.mrb[0].mxu0 %v1824
  %v1961 = vpop.f32.mrb[0].mxu0
  %v1962 = vadd.f32 %v1853, %v1961
  %v1963 = vpop.f32.mrb[0].mxu0
  %1964 = vmatprep.mubr.f32.mxu0 0.0
  %1965 = vmatmul.mubr.f32.gmra.mrb[0].mxu0 %v1825
  %v1966 = vpop.f32.mrb[0].mxu0
  %v1967 = vadd.f32 %v1853, %v1966
  %v1968 = vpop.f32.mrb[0].mxu0
  %1969 = vmatprep.mubr.f32.mxu0 0.0
  %1970 = vmatmul.mubr.f32.gmra.mrb[0].mxu0 %v1826
  %v1971 = vpop.f32.mrb[0].mxu0
  %v1972 = vadd.f32 %v1853, %v1971
  %v1973 = vpop.f32.mrb[0].mxu0
  %1974 = vmatprep.mubr.f32.mxu0 0.0
  %1975 = vmatmul.mubr.f32.gmra.mrb[0].mxu0 %v1827
  %v1976 = vpop.f32.mrb[0].mxu0
  %v1977 = vadd.f32 %v1853, %v1976
  %v1978 = vpop.f32.mrb[0].mxu0
  %1979 = vmatprep.mubr.f32.mxu0 0.0
  %1980 = vmatmul.mubr.f32.gmra.mrb[0].mxu0 %v1828
  %v1981 = vpop.f32.mrb[0].mxu0
  %v1982 = vadd.f32 %v1853, %v1981
  %v1983 = vpop.f32.mrb[0].mxu0
  %1984 = vmatprep.mubr.f32.mxu0 0.0
  %1985 = vmatmul.mubr.f32.gmra.mrb[0].mxu0 %v1829
  %v1986 = vpop.f32.mrb[0].mxu0
  %v1987 = vadd.f32 %v1853, %v1986
  %v1988 = vpop.f32.mrb[0].mxu0
  %1989 = vmatprep.mubr.f32.mxu0 0.0
  %1990 = vmatmul.mubr.f32.gmra.mrb[0].mxu0 %v1830
  %v1991 = vpop.f32.mrb[0].mxu0
  %v1992 = vadd.f32 %v1853, %v1991
  %v1993 = vpop.f32.mrb[0].mxu0
  %1994 = vmatprep.mubr.f32.mxu0 0.0
  %1995 = vmatmul.mubr.f32.gmra.mrb[0].mxu0 %v1831
  %v1996 = vpop.f32.mrb[0].mxu0
  %v1997 = vadd.f32 %v1853, %v1996
  %v1998 = vpop.f32.mrb[0].mxu0
  %1999 = vdwg.mxu0
  %v2000 = vadd.f32 %v1632, %v1922
  %v2001 = vadd.f32 %v1633, %v1927
  %v2002 = vadd.f32 %v1634, %v1932
  %v2003 = vadd.f32 %v1635, %v1937
  %v2004 = vadd.f32 %v1636, %v1942
  %v2005 = vadd.f32 %v1637, %v1947
  %v2006 = vadd.f32 %v1638, %v1952
  %v2007 = vadd.f32 %v1639, %v1957
  %v2008 = vadd.f32 %v1640, %v1962
  %v2009 = vadd.f32 %v1641, %v1967
  %v2010 = vadd.f32 %v1642, %v1972
  %v2011 = vadd.f32 %v1643, %v1977
  %v2012 = vadd.f32 %v1644, %v1982
  %v2013 = vadd.f32 %v1645, %v1987
  %v2014 = vadd.f32 %v1646, %v1992
  %v2015 = vadd.f32 %v1647, %v1997
  %2016 = vst [vmem:[%s19] sm:$0xff] %v2000
  %2017 = vst [vmem:[%s19 + $0x8] sm:$0xff] %v2001
  %2018 = vst [vmem:[%s19 + $0x10] sm:$0xff] %v2002
  %2019 = vst [vmem:[%s19 + $0x18] sm:$0xff] %v2003
  %2020 = vst [vmem:[%s19 + $0x20] sm:$0xff] %v2004
  %2021 = vst [vmem:[%s19 + $0x28] sm:$0xff] %v2005
  %2022 = vst [vmem:[%s19 + $0x30] sm:$0xff] %v2006
  %2023 = vst [vmem:[%s19 + $0x38] sm:$0xff] %v2007
  %2024 = vst [vmem:[%s19 + $0x40] sm:$0xff] %v2008
  %2025 = vst [vmem:[%s19 + $0x48] sm:$0xff] %v2009
  %2026 = vst [vmem:[%s19 + $0x50] sm:$0xff] %v2010
  %2027 = vst [vmem:[%s19 + $0x58] sm:$0xff] %v2011
  %2028 = vst [vmem:[%s19 + $0x60] sm:$0xff] %v2012
  %2029 = vst [vmem:[%s19 + $0x68] sm:$0xff] %v2013
  %2030 = vst [vmem:[%s19 + $0x70] sm:$0xff] %v2014
  %2031 = vst [vmem:[%s19 + $0x78] sm:$0xff] %v2015
  // Predicated region
  $region78: #{subgraph_gnn_forward.1} parent=0 // pred_check
    _
  $region79: #{subgraph_gnn_forward.1} parent=0 // pred_check_branch
    %2033 = sbr.rel (0) target = $region81
  $region80: #{subgraph_gnn_forward.1} parent=0 // pred_region
    _
  $region81: #{subgraph_gnn_forward.1} parent=0 // pred_fallthru
    _
  // Predicated region
  $region82: #{subgraph_gnn_forward.1} parent=0 // pred_check
    _
  $region83: #{subgraph_gnn_forward.1} parent=0 // pred_check_branch
    %2035 = sbr.rel (0) target = $region85
  $region84: #{subgraph_gnn_forward.1} parent=0 // pred_region
    _
  $region85: #{subgraph_gnn_forward.1} parent=0 // pred_fallthru
    _

</llo_original>
